<compile_context>
chip_gen: v5e
topology: v5e:2x2
jax: 0.10.0
libtpu: 0.0.40
codegen_flags: <defaults>
</compile_context>

<pallas_src>
import functools

import jax
import jax.numpy as jnp
from jax.experimental import pallas as pl
from jax.experimental.pallas import tpu as pltpu

OUT_W = 128  # lane-dense packed output width (multiple of 128)


# ----------------------------------------------------------------------------
# Fused Pallas kernel: one grid step == one time step
#   (GAT layer1 + ELU) -> (GAT layer2 + ELU) -> GRU step -> heads -> SIR physics
# ----------------------------------------------------------------------------
def _stan_kernel(dyn_ref, cI_ref, cR_ref, I_ref, R_ref, N_ref, h0_ref,
                 srcm_ref, dstm_ref, dstmT_ref,
                 w1_ref, p1s_ref, p1d_ref, e1_ref,
                 w2_ref, p2s_ref, p2d_ref, e2_ref,
                 gw_ref, gb_ref, hw_ref, hc_ref, hb_ref,
                 out_ref, h_scr, *, G, PW):
    t = pl.program_id(0)

    @pl.when(t == 0)
    def _():
        h_scr[...] = h0_ref[...]          # initial GRU hidden state

    srcm = srcm_ref[...]                  # [E, B] one-hot of src
    dstm = dstm_ref[...]                  # [E, B] one-hot of dst
    dstmT = dstmT_ref[...]                # [B, E]

    def gat(x, w_ref, ps_ref, pd_ref, exp_ref):
        # all heads at once
        h = jnp.dot(x, w_ref[...], preferred_element_type=jnp.float32)       # [B, H*D]
        s_src = jnp.dot(x, ps_ref[...], preferred_element_type=jnp.float32)  # [B, H]
        s_dst = jnp.dot(x, pd_ref[...], preferred_element_type=jnp.float32)  # [B, H]
        e = (jnp.dot(srcm, s_src, preferred_element_type=jnp.float32)
             + jnp.dot(dstm, s_dst, preferred_element_type=jnp.float32))     # [E, H]
        e = jnp.where(e > 0, e, 0.01 * e)                                    # leaky_relu
        m = jnp.max(e, axis=0, keepdims=True)
        p = jnp.exp(e - m)
        inv = pl.reciprocal(jnp.sum(p, axis=0, keepdims=True), approx=True)
        alpha = p * inv                                                      # softmax over ALL edges
        h_src = jnp.dot(srcm, h, preferred_element_type=jnp.float32)         # [E, H*D]
        # broadcast per-head alpha across that head's D columns via constant matrix
        weighted = h_src * jnp.dot(alpha, exp_ref[...],
                                   preferred_element_type=jnp.float32)
        out = jnp.dot(dstmT, weighted, preferred_element_type=jnp.float32)   # scatter_add by dst
        return jnp.where(out > 0, out, jnp.exp(out) - 1.0)                   # ELU

    x = dyn_ref[0]                                                           # [B, Din]
    x = gat(x, w1_ref, p1s_ref, p1d_ref, e1_ref)
    x = gat(x, w2_ref, p2s_ref, p2d_ref, e2_ref)

    # ---- fused GRU step (single matmul for gi/gh) ----
    hp = h_scr[...]                                                          # [B, G]
    g = (jnp.dot(jnp.concatenate([x, hp], axis=1), gw_ref[...],
                 preferred_element_type=jnp.float32) + gb_ref[...])          # [B, 4G]
    r = jax.nn.sigmoid(g[:, 0:G])
    z = jax.nn.sigmoid(g[:, G:2 * G])
    n = jnp.tanh(g[:, 2 * G:3 * G] + r * g[:, 3 * G:4 * G])
    h_new = (1.0 - z) * n + z * hp
    h_scr[...] = h_new

    # ---- fused prediction heads (res_I | res_R | res_sir in one matmul) ----
    cI = cI_ref[0]                                                           # [B, 1]
    cR = cR_ref[0]
    hd = (jnp.dot(h_new, hw_ref[...], preferred_element_type=jnp.float32)
          + cI * hc_ref[0:1, :] + cR * hc_ref[1:2, :] + hb_ref[...])         # [B, 2PW+2]
    pred_I = hd[:, 0:PW]
    pred_R = hd[:, PW:2 * PW]
    sir = jax.nn.sigmoid(hd[:, 2 * PW:2 * PW + 2])
    a = sir[:, 0:1]                                                          # alpha [B,1]
    b = sir[:, 1:2]                                                          # beta  [B,1]

    # ---- SIR physics (reproduces torch broadcast [B,1]*[1,B] -> [B,B]) ----
    I_row = I_ref[0]                                                         # [1, B]
    R_row = R_ref[0]
    N_row = N_ref[...]                                                       # [1, B]
    S = jnp.maximum(N_row - I_row - R_row, 0.0)
    term = I_row * S * pl.reciprocal(N_row, approx=True)
    phy_I = a * term - b * I_row                                             # [B, B]
    phy_R = b * I_row                                                        # [B, B]

    # ---- lane-dense packed output store ----
    B = h_new.shape[0]
    pieces = [pred_I, pred_R, phy_I, phy_R, h_new]
    pad_w = OUT_W - (2 * PW + 2 * B + G)
    if pad_w > 0:
        pieces.append(jnp.zeros((B, pad_w), jnp.float32))
    out_ref[0] = jnp.concatenate(pieces, axis=1)                             # [B, OUT_W]


def stan_forward_pallas(kp, srcm, dstm, dynamic, cI, cR, N, I, R, h=None):
    T, B, _ = dynamic.shape
    G = kp['head_w'].shape[0]
    PW = (kp['head_w'].shape[1] - 2) // 2
    assert 2 * PW + 2 * B + G <= OUT_W

    h0 = jnp.zeros((B, G), jnp.float32) if h is None else h[0]
    N_row = N.reshape(1, B)
    I_rows = jnp.transpose(I, (0, 2, 1))        # [T, 1, B]
    R_rows = jnp.transpose(R, (0, 2, 1))
    dstm_t = dstm.T                             # computed once, resident in VMEM

    def per_t(shape):
        nd = len(shape)
        return pl.BlockSpec((1,) + tuple(shape[1:]),
                            lambda t, _n=nd: (t,) + (0,) * (_n - 1))

    def const(arr):
        nd = arr.ndim
        return pl.BlockSpec(arr.shape, lambda t, _n=nd: (0,) * _n)

    args = [
        dynamic, cI, cR, I_rows, R_rows,                       # per-timestep blocks
        N_row, h0, srcm, dstm, dstm_t,                         # resident constants
        kp['l1']['w_cat'], kp['l1']['p_src'], kp['l1']['p_dst'], kp['l1']['exp'],
        kp['l2']['w_cat'], kp['l2']['p_src'], kp['l2']['p_dst'], kp['l2']['exp'],
        kp['gru_w'], kp['gru_b'], kp['head_w'], kp['head_c'], kp['head_b'],
    ]
    in_specs = ([per_t(a.shape) for a in args[:5]]
                + [const(a) for a in args[5:]])

    out = pl.pallas_call(
        functools.partial(_stan_kernel, G=G, PW=PW),
        out_shape=jax.ShapeDtypeStruct((T, B, OUT_W), jnp.float32),
        grid=(T,),
        in_specs=in_specs,
        out_specs=pl.BlockSpec((1, B, OUT_W), lambda t: (t, 0, 0)),
        scratch_shapes=[pltpu.VMEM((B, G), jnp.float32)],       # carried GRU state
        compiler_params=pltpu.CompilerParams(
            dimension_semantics=("arbitrary",),                 # sequential recurrence
            vmem_limit_bytes=64 * 1024 * 1024),
    )(*args)

    pred_I = out[:, :, 0:PW]
    pred_R = out[:, :, PW:2 * PW]
    phy_I = out[:, :, 2 * PW:2 * PW + B]                        # [T, B, B]
    phy_R = out[:, :, 2 * PW + B:2 * PW + 2 * B]
    h_fin = out[T - 1, :, 2 * PW + 2 * B:2 * PW + 2 * B + G]
    # mirrors torch `.expand(-1,-1,pred_window)` (requires B == PW or B == 1)
    phy_I = jnp.broadcast_to(phy_I, (T, B, PW))
    phy_R = jnp.broadcast_to(phy_R, (T, B, PW))
    return pred_I, pred_R, phy_I, phy_R, h_fin[None]


# ----------------------------------------------------------------------------
# Pure-JAX reference (mirrors the PyTorch code, incl. its broadcasting quirk)
# ----------------------------------------------------------------------------
def _elu(x):
    return jnp.where(x > 0, x, jnp.exp(x) - 1.0)


def _ref_gat(x, src, dst, w_t, a_vec):
    outs = []
    H = w_t.shape[0]
    for head in range(H):
        h = x @ w_t[head]
        h_src = h[src]
        h_dst = h[dst]
        e = jnp.concatenate([h_src, h_dst], axis=1) @ a_vec[head]
        e = jnp.where(e > 0, e, 0.01 * e)
        alpha = jax.nn.softmax(e, axis=0)
        out_head = jnp.zeros_like(h).at[dst].add(h_src * alpha[:, None])
        outs.append(out_head)
    return jnp.concatenate(outs, axis=1)


def stan_forward_ref(rp, edge_index, dynamic, cI, cR, N, I, R, pred_window):
    src, dst = edge_index
    T, B, _ = dynamic.shape
    G = rp['gru']['w_ih'].shape[0] // 3
    h = jnp.zeros((B, G), jnp.float32)
    pI_l, pR_l, phI_l, phR_l = [], [], [], []
    for t in range(T):
        x = dynamic[t]
        x = _elu(_ref_gat(x, src, dst, rp['l1']['w_t'], rp['l1']['a']))
        x = _elu(_ref_gat(x, src, dst, rp['l2']['w_t'], rp['l2']['a']))
        gi = x @ rp['gru']['w_ih'].T + rp['gru']['b_ih']
        gh = h @ rp['gru']['w_hh'].T + rp['gru']['b_hh']
        r = jax.nn.sigmoid(gi[:, :G] + gh[:, :G])
        z = jax.nn.sigmoid(gi[:, G:2 * G] + gh[:, G:2 * G])
        n = jnp.tanh(gi[:, 2 * G:] + r * gh[:, 2 * G:])
        h = (1 - z) * n + z * h
        out = h[:, None, :]
        hc = jnp.concatenate([out, cI[t][:, None, :], cR[t][:, None, :]], axis=2)
        pred_I = hc @ rp['res_I']['w'].T + rp['res_I']['b']
        pred_R = hc @ rp['res_R']['w'].T + rp['res_R']['b']
        sir = jax.nn.sigmoid(hc @ rp['res_sir']['w'].T + rp['res_sir']['b'])
        alpha, beta = sir[:, :, 0:1], sir[:, :, 1:2]
        I_s, R_s = I[t], R[t]
        S = jnp.maximum(N - I_s - R_s, 0.0)
        phy_I = (alpha * I_s * (S / N) - beta * I_s)[..., 0]
        phy_R = (beta * I_s)[..., 0]
        pI_l.append(pred_I); pR_l.append(pred_R)
        phI_l.append(phy_I); phR_l.append(phy_R)
    pred_I = jnp.transpose(jnp.concatenate(pI_l, axis=1), (1, 0, 2))
    pred_R = jnp.transpose(jnp.concatenate(pR_l, axis=1), (1, 0, 2))
    phy_I = jnp.broadcast_to(jnp.stack(phI_l, 0), (T, B, pred_window))
    phy_R = jnp.broadcast_to(jnp.stack(phR_l, 0), (T, B, pred_window))
    return pred_I, pred_R, phy_I, phy_R, h[None]


# ----------------------------------------------------------------------------
# Deterministic parameter init; builds both reference params and fused kernel params
# ----------------------------------------------------------------------------
def init_params(key, in_dim, hd1, hd2, H, G, PW):
    ks = jax.random.split(key, 12)
    D1 = hd1 * H
    D2 = hd2 * H

    def nrm(k, shape, fan_in):
        return (jax.random.normal(k, shape, jnp.float32) / jnp.sqrt(fan_in)).astype(jnp.float32)

    w1 = nrm(ks[0], (H, hd1, in_dim), in_dim)       # torch Linear weights [out,in] per head
    a1 = nrm(ks[1], (H, 2 * hd1), 2 * hd1)
    w2 = nrm(ks[2], (H, hd2, D1), D1)
    a2 = nrm(ks[3], (H, 2 * hd2), 2 * hd2)
    w_ih = nrm(ks[4], (3 * G, D2), D2)
    w_hh = nrm(ks[5], (3 * G, G), G)
    b_ih = nrm(ks[6], (3 * G,), G)
    b_hh = nrm(ks[7], (3 * G,), G)
    W_I = nrm(ks[8], (PW, G + 2), G + 2)
    b_I = jnp.zeros((PW,), jnp.float32)
    W_R = nrm(ks[9], (PW, G + 2), G + 2)
    b_R = jnp.zeros((PW,), jnp.float32)
    W_S = nrm(ks[10], (2, G + 2), G + 2)
    b_S = jnp.zeros((2,), jnp.float32)

    ref = {
        'l1': {'w_t': jnp.transpose(w1, (0, 2, 1)), 'a': a1},
        'l2': {'w_t': jnp.transpose(w2, (0, 2, 1)), 'a': a2},
        'gru': {'w_ih': w_ih, 'w_hh': w_hh, 'b_ih': b_ih, 'b_hh': b_hh},
        'res_I': {'w': W_I, 'b': b_I},
        'res_R': {'w': W_R, 'b': b_R},
        'res_sir': {'w': W_S, 'b': b_S},
    }

    def gat_pack(w, a, hd):
        # w: [H, hd, Din]; a: [H, 2*hd]
        din = w.shape[2]
        w_cat = jnp.transpose(w, (2, 0, 1)).reshape(din, H * hd)       # [Din, H*hd]
        p_src = jnp.einsum('hod,ho->dh', w, a[:, :hd])                 # [Din, H]
        p_dst = jnp.einsum('hod,ho->dh', w, a[:, hd:])                 # [Din, H]
        exp = jnp.kron(jnp.eye(H, dtype=jnp.float32),
                       jnp.ones((1, hd), jnp.float32))                 # [H, H*hd]
        return {'w_cat': w_cat, 'p_src': p_src, 'p_dst': p_dst, 'exp': exp}

    # fused GRU weight [D2+G, 4G]: cols [r | z | n_from_x | n_from_h]
    w_ih_t = w_ih.T
    w_hh_t = w_hh.T
    gru_w = jnp.concatenate([
        jnp.concatenate([w_ih_t, jnp.zeros((D2, G), jnp.float32)], axis=1),
        jnp.concatenate([w_hh_t[:, :2 * G], jnp.zeros((G, G), jnp.float32),
                         w_hh_t[:, 2 * G:]], axis=1)], axis=0)
    gru_b = jnp.concatenate([b_ih[:2 * G] + b_hh[:2 * G],
                             b_ih[2 * G:], b_hh[2 * G:]])[None, :]     # [1, 4G]

    # fused heads: [res_I | res_R | res_sir]
    head_w = jnp.concatenate([W_I[:, :G].T, W_R[:, :G].T, W_S[:, :G].T], axis=1)   # [G, 2PW+2]
    head_c = jnp.concatenate([W_I[:, G:].T, W_R[:, G:].T, W_S[:, G:].T], axis=1)   # [2, 2PW+2]
    head_b = jnp.concatenate([b_I, b_R, b_S])[None, :]                             # [1, 2PW+2]

    kern = {
        'l1': gat_pack(w1, a1, hd1),
        'l2': gat_pack(w2, a2, hd2),
        'gru_w': gru_w, 'gru_b': gru_b,
        'head_w': head_w, 'head_c': head_c, 'head_b': head_b,
    }
    return ref, kern


if __name__ == "__main__":
    key = jax.random.PRNGKey(0)
    T = 5
    B = 4            # num graph nodes (== per-step "batch")
    in_dim = 8
    hd1, hd2 = 8, 8
    H = 2            # num_heads
    G = 16           # gru_dim
    PW = 4           # pred_window (must equal B to reproduce torch .expand semantics)

    kp_key, data_key = jax.random.split(key)
    ref_params, kern_params = init_params(kp_key, in_dim, hd1, hd2, H, G, PW)

    dk = jax.random.split(data_key, 6)
    dynamic = jax.random.normal(dk[0], (T, B, in_dim), jnp.float32)
    cI = jax.random.uniform(dk[1], (T, B, 1), jnp.float32)
    cR = jax.random.uniform(dk[2], (T, B, 1), jnp.float32)
    N = jax.random.uniform(dk[3], (B, 1), jnp.float32, minval=100.0, maxval=200.0)
    I = jax.random.uniform(dk[4], (T, B, 1), jnp.float32, minval=0.0, maxval=20.0)
    R = jax.random.uniform(dk[5], (T, B, 1), jnp.float32, minval=0.0, maxval=20.0)

    # graph (g.edge_index): [2, E]
    src = jnp.array([0, 1, 2, 3, 0, 1, 2, 3], jnp.int32)
    dst = jnp.array([1, 2, 3, 0, 2, 3, 0, 1], jnp.int32)
    srcm = jax.nn.one_hot(src, B, dtype=jnp.float32)   # [E, B]
    dstm = jax.nn.one_hot(dst, B, dtype=jnp.float32)   # [E, B]

    out = stan_forward_pallas(kern_params, srcm, dstm, dynamic, cI, cR, N, I, R)
    out = jax.block_until_ready(out)

    ref = stan_forward_ref(ref_params, (src, dst), dynamic, cI, cR, N, I, R, PW)
    ref = jax.block_until_ready(ref)

    names = ["pred_I", "pred_R", "phy_I", "phy_R", "h"]
    for name, a, b in zip(names, out, ref):
        assert a.shape == b.shape, (name, a.shape, b.shape)
        assert jnp.allclose(a, b, rtol=5e-2, atol=5e-2), f"mismatch in {name}"

    print("KERNEL_OK")
</pallas_src>

<mosaic_0001>
module attributes {stable_mosaic.version = 11 : i64} {
  func.func @_stan_kernel(%arg0: i32, %arg1: memref<1x4x8xf32, #tpu.memory_space<vmem>>, %arg2: memref<1x4x1xf32, #tpu.memory_space<vmem>>, %arg3: memref<1x4x1xf32, #tpu.memory_space<vmem>>, %arg4: memref<1x1x4xf32, #tpu.memory_space<vmem>>, %arg5: memref<1x1x4xf32, #tpu.memory_space<vmem>>, %arg6: memref<1x4xf32, #tpu.memory_space<vmem>>, %arg7: memref<4x16xf32, #tpu.memory_space<vmem>>, %arg8: memref<8x4xf32, #tpu.memory_space<vmem>>, %arg9: memref<8x4xf32, #tpu.memory_space<vmem>>, %arg10: memref<4x8xf32, #tpu.memory_space<vmem>>, %arg11: memref<8x16xf32, #tpu.memory_space<vmem>>, %arg12: memref<8x2xf32, #tpu.memory_space<vmem>>, %arg13: memref<8x2xf32, #tpu.memory_space<vmem>>, %arg14: memref<2x16xf32, #tpu.memory_space<vmem>>, %arg15: memref<16x16xf32, #tpu.memory_space<vmem>>, %arg16: memref<16x2xf32, #tpu.memory_space<vmem>>, %arg17: memref<16x2xf32, #tpu.memory_space<vmem>>, %arg18: memref<2x16xf32, #tpu.memory_space<vmem>>, %arg19: memref<32x64xf32, #tpu.memory_space<vmem>>, %arg20: memref<1x64xf32, #tpu.memory_space<vmem>>, %arg21: memref<16x10xf32, #tpu.memory_space<vmem>>, %arg22: memref<2x10xf32, #tpu.memory_space<vmem>>, %arg23: memref<1x10xf32, #tpu.memory_space<vmem>>, %arg24: memref<1x4x128xf32, #tpu.memory_space<vmem>>, %arg25: memref<4x16xf32, #tpu.memory_space<vmem>>) attributes {dimension_semantics = [#tpu.dimension_semantics<arbitrary>], iteration_bounds = array<i64: 5>, scalar_prefetch = 0 : i64, scratch_operands = 1 : i64, tpu.core_type = #tpu.core_type<tc>, window_params = [{transform_indices = @transform_0, window_bounds = array<i64: 1, 4, 8>}, {transform_indices = @transform_1, window_bounds = array<i64: 1, 4, 1>}, {transform_indices = @transform_2, window_bounds = array<i64: 1, 4, 1>}, {transform_indices = @transform_3, window_bounds = array<i64: 1, 1, 4>}, {transform_indices = @transform_4, window_bounds = array<i64: 1, 1, 4>}, {pipeline_mode = #tpu.pipeline_mode<synchronous>, transform_indices = @transform_5, window_bounds = array<i64: 1, 4>}, {pipeline_mode = #tpu.pipeline_mode<synchronous>, transform_indices = @transform_6, window_bounds = array<i64: 4, 16>}, {pipeline_mode = #tpu.pipeline_mode<synchronous>, transform_indices = @transform_7, window_bounds = array<i64: 8, 4>}, {pipeline_mode = #tpu.pipeline_mode<synchronous>, transform_indices = @transform_8, window_bounds = array<i64: 8, 4>}, {pipeline_mode = #tpu.pipeline_mode<synchronous>, transform_indices = @transform_9, window_bounds = array<i64: 4, 8>}, {pipeline_mode = #tpu.pipeline_mode<synchronous>, transform_indices = @transform_10, window_bounds = array<i64: 8, 16>}, {pipeline_mode = #tpu.pipeline_mode<synchronous>, transform_indices = @transform_11, window_bounds = array<i64: 8, 2>}, {pipeline_mode = #tpu.pipeline_mode<synchronous>, transform_indices = @transform_12, window_bounds = array<i64: 8, 2>}, {pipeline_mode = #tpu.pipeline_mode<synchronous>, transform_indices = @transform_13, window_bounds = array<i64: 2, 16>}, {pipeline_mode = #tpu.pipeline_mode<synchronous>, transform_indices = @transform_14, window_bounds = array<i64: 16, 16>}, {pipeline_mode = #tpu.pipeline_mode<synchronous>, transform_indices = @transform_15, window_bounds = array<i64: 16, 2>}, {pipeline_mode = #tpu.pipeline_mode<synchronous>, transform_indices = @transform_16, window_bounds = array<i64: 16, 2>}, {pipeline_mode = #tpu.pipeline_mode<synchronous>, transform_indices = @transform_17, window_bounds = array<i64: 2, 16>}, {pipeline_mode = #tpu.pipeline_mode<synchronous>, transform_indices = @transform_18, window_bounds = array<i64: 32, 64>}, {pipeline_mode = #tpu.pipeline_mode<synchronous>, transform_indices = @transform_19, window_bounds = array<i64: 1, 64>}, {pipeline_mode = #tpu.pipeline_mode<synchronous>, transform_indices = @transform_20, window_bounds = array<i64: 16, 10>}, {pipeline_mode = #tpu.pipeline_mode<synchronous>, transform_indices = @transform_21, window_bounds = array<i64: 2, 10>}, {pipeline_mode = #tpu.pipeline_mode<synchronous>, transform_indices = @transform_22, window_bounds = array<i64: 1, 10>}, {transform_indices = @transform_23, window_bounds = array<i64: 1, 4, 128>}]} {
    %c0_i32 = arith.constant 0 : i32
    %0 = arith.cmpi eq, %arg0, %c0_i32 : i32
    %1 = arith.extui %0 : i1 to i32
    %c0_i32_0 = arith.constant 0 : i32
    %2 = arith.cmpi ne, %1, %c0_i32_0 : i32
    scf.if %2 {
      %c0_92 = arith.constant 0 : index
      %c0_93 = arith.constant 0 : index
      %164 = vector.load %arg7[%c0_92, %c0_93] : memref<4x16xf32, #tpu.memory_space<vmem>>, vector<4x16xf32>
      %c0_94 = arith.constant 0 : index
      %c0_95 = arith.constant 0 : index
      %165 = vector.load %arg25[%c0_94, %c0_95] : memref<4x16xf32, #tpu.memory_space<vmem>>, vector<4x16xf32>
      tpu.vector_store %arg25[%c0_94, %c0_95], %164 {strides = array<i32>} : memref<4x16xf32, #tpu.memory_space<vmem>>, vector<4x16xf32>,
    } else {
    }
    %c0 = arith.constant 0 : index
    %c0_1 = arith.constant 0 : index
    %3 = vector.load %arg8[%c0, %c0_1] : memref<8x4xf32, #tpu.memory_space<vmem>>, vector<8x4xf32>
    %c0_2 = arith.constant 0 : index
    %c0_3 = arith.constant 0 : index
    %4 = vector.load %arg9[%c0_2, %c0_3] : memref<8x4xf32, #tpu.memory_space<vmem>>, vector<8x4xf32>
    %c0_4 = arith.constant 0 : index
    %c0_5 = arith.constant 0 : index
    %5 = vector.load %arg10[%c0_4, %c0_5] : memref<4x8xf32, #tpu.memory_space<vmem>>, vector<4x8xf32>
    %c0_6 = arith.constant 0 : index
    %c0_7 = arith.constant 0 : index
    %c0_8 = arith.constant 0 : index
    %6 = vector.load %arg1[%c0_6, %c0_7, %c0_8] : memref<1x4x8xf32, #tpu.memory_space<vmem>>, vector<1x4x8xf32>
    %7 = vector.shape_cast %6 : vector<1x4x8xf32> to vector<4x8xf32>
    %c0_9 = arith.constant 0 : index
    %c0_10 = arith.constant 0 : index
    %8 = vector.load %arg11[%c0_9, %c0_10] : memref<8x16xf32, #tpu.memory_space<vmem>>, vector<8x16xf32>
    %cst = arith.constant dense<0.000000e+00> : vector<4x16xf32>
    %9 = tpu.matmul %7, %8, %cst {dimension_numbers = #tpu.dot_dimension_numbers<[1], [0], [0], [1], [0, 0, 1, 1], [], []>} : vector<4x8xf32>, vector<8x16xf32>, vector<4x16xf32> -> vector<4x16xf32>
    %c0_11 = arith.constant 0 : index
    %c0_12 = arith.constant 0 : index
    %10 = vector.load %arg12[%c0_11, %c0_12] : memref<8x2xf32, #tpu.memory_space<vmem>>, vector<8x2xf32>
    %cst_13 = arith.constant dense<0.000000e+00> : vector<4x2xf32>
    %11 = tpu.matmul %7, %10, %cst_13 {dimension_numbers = #tpu.dot_dimension_numbers<[1], [0], [0], [1], [0, 0, 1, 1], [], []>} : vector<4x8xf32>, vector<8x2xf32>, vector<4x2xf32> -> vector<4x2xf32>
    %c0_14 = arith.constant 0 : index
    %c0_15 = arith.constant 0 : index
    %12 = vector.load %arg13[%c0_14, %c0_15] : memref<8x2xf32, #tpu.memory_space<vmem>>, vector<8x2xf32>
    %cst_16 = arith.constant dense<0.000000e+00> : vector<4x2xf32>
    %13 = tpu.matmul %7, %12, %cst_16 {dimension_numbers = #tpu.dot_dimension_numbers<[1], [0], [0], [1], [0, 0, 1, 1], [], []>} : vector<4x8xf32>, vector<8x2xf32>, vector<4x2xf32> -> vector<4x2xf32>
    %cst_17 = arith.constant dense<0.000000e+00> : vector<8x2xf32>
    %14 = tpu.matmul %3, %11, %cst_17 {dimension_numbers = #tpu.dot_dimension_numbers<[1], [0], [0], [1], [0, 0, 1, 1], [], []>} : vector<8x4xf32>, vector<4x2xf32>, vector<8x2xf32> -> vector<8x2xf32>
    %cst_18 = arith.constant dense<0.000000e+00> : vector<8x2xf32>
    %15 = tpu.matmul %4, %13, %cst_18 {dimension_numbers = #tpu.dot_dimension_numbers<[1], [0], [0], [1], [0, 0, 1, 1], [], []>} : vector<8x4xf32>, vector<4x2xf32>, vector<8x2xf32> -> vector<8x2xf32>
    %16 = arith.addf %14, %15 : vector<8x2xf32>
    %cst_19 = arith.constant 0.000000e+00 : f32
    %17 = vector.broadcast %cst_19 : f32 to vector<8x2xf32>
    %18 = arith.cmpf ogt, %16, %17 : vector<8x2xf32>
    %cst_20 = arith.constant 0.00999999977 : f32
    %19 = vector.broadcast %cst_20 : f32 to vector<8x2xf32>
    %20 = arith.mulf %19, %16 : vector<8x2xf32>
    %21 = arith.select %18, %16, %20 : vector<8x2xi1>, vector<8x2xf32>
    %cst_21 = arith.constant dense<0xFF800000> : vector<2xf32>
    %22 = vector.multi_reduction <maximumf>, %21, %cst_21 [0] : vector<8x2xf32> to vector<2xf32>
    %23 = vector.shape_cast %22 : vector<2xf32> to vector<1x2xf32>
    %24 = vector.broadcast %23 : vector<1x2xf32> to vector<8x2xf32>
    %25 = arith.subf %21, %24 : vector<8x2xf32>
    %26 = math.exp %25 : vector<8x2xf32>
    %cst_22 = arith.constant dense<0.000000e+00> : vector<2xf32>
    %27 = vector.multi_reduction <add>, %26, %cst_22 [0] : vector<8x2xf32> to vector<2xf32>
    %28 = vector.shape_cast %27 : vector<2xf32> to vector<1x2xf32>
    %29 = tpu.reciprocal %28 {approx = true} : vector<1x2xf32> -> vector<1x2xf32>
    %30 = vector.broadcast %29 : vector<1x2xf32> to vector<8x2xf32>
    %31 = arith.mulf %26, %30 : vector<8x2xf32>
    %cst_23 = arith.constant dense<0.000000e+00> : vector<8x16xf32>
    %32 = tpu.matmul %3, %9, %cst_23 {dimension_numbers = #tpu.dot_dimension_numbers<[1], [0], [0], [1], [0, 0, 1, 1], [], []>} : vector<8x4xf32>, vector<4x16xf32>, vector<8x16xf32> -> vector<8x16xf32>
    %c0_24 = arith.constant 0 : index
    %c0_25 = arith.constant 0 : index
    %33 = vector.load %arg14[%c0_24, %c0_25] : memref<2x16xf32, #tpu.memory_space<vmem>>, vector<2x16xf32>
    %cst_26 = arith.constant dense<0.000000e+00> : vector<8x16xf32>
    %34 = tpu.matmul %31, %33, %cst_26 {dimension_numbers = #tpu.dot_dimension_numbers<[1], [0], [0], [1], [0, 0, 1, 1], [], []>} : vector<8x2xf32>, vector<2x16xf32>, vector<8x16xf32> -> vector<8x16xf32>
    %35 = arith.mulf %32, %34 : vector<8x16xf32>
    %cst_27 = arith.constant dense<0.000000e+00> : vector<4x16xf32>
    %36 = tpu.matmul %5, %35, %cst_27 {dimension_numbers = #tpu.dot_dimension_numbers<[1], [0], [0], [1], [0, 0, 1, 1], [], []>} : vector<4x8xf32>, vector<8x16xf32>, vector<4x16xf32> -> vector<4x16xf32>
    %cst_28 = arith.constant 0.000000e+00 : f32
    %37 = vector.broadcast %cst_28 : f32 to vector<4x16xf32>
    %38 = arith.cmpf ogt, %36, %37 : vector<4x16xf32>
    %39 = math.exp %36 : vector<4x16xf32>
    %cst_29 = arith.constant 1.000000e+00 : f32
    %40 = vector.broadcast %cst_29 : f32 to vector<4x16xf32>
    %41 = arith.subf %39, %40 : vector<4x16xf32>
    %42 = arith.select %38, %36, %41 : vector<4x16xi1>, vector<4x16xf32>
    %c0_30 = arith.constant 0 : index
    %c0_31 = arith.constant 0 : index
    %43 = vector.load %arg15[%c0_30, %c0_31] : memref<16x16xf32, #tpu.memory_space<vmem>>, vector<16x16xf32>
    %cst_32 = arith.constant dense<0.000000e+00> : vector<4x16xf32>
    %44 = tpu.matmul %42, %43, %cst_32 {dimension_numbers = #tpu.dot_dimension_numbers<[1], [0], [0], [1], [0, 0, 1, 1], [], []>} : vector<4x16xf32>, vector<16x16xf32>, vector<4x16xf32> -> vector<4x16xf32>
    %c0_33 = arith.constant 0 : index
    %c0_34 = arith.constant 0 : index
    %45 = vector.load %arg16[%c0_33, %c0_34] : memref<16x2xf32, #tpu.memory_space<vmem>>, vector<16x2xf32>
    %cst_35 = arith.constant dense<0.000000e+00> : vector<4x2xf32>
    %46 = tpu.matmul %42, %45, %cst_35 {dimension_numbers = #tpu.dot_dimension_numbers<[1], [0], [0], [1], [0, 0, 1, 1], [], []>} : vector<4x16xf32>, vector<16x2xf32>, vector<4x2xf32> -> vector<4x2xf32>
    %c0_36 = arith.constant 0 : index
    %c0_37 = arith.constant 0 : index
    %47 = vector.load %arg17[%c0_36, %c0_37] : memref<16x2xf32, #tpu.memory_space<vmem>>, vector<16x2xf32>
    %cst_38 = arith.constant dense<0.000000e+00> : vector<4x2xf32>
    %48 = tpu.matmul %42, %47, %cst_38 {dimension_numbers = #tpu.dot_dimension_numbers<[1], [0], [0], [1], [0, 0, 1, 1], [], []>} : vector<4x16xf32>, vector<16x2xf32>, vector<4x2xf32> -> vector<4x2xf32>
    %cst_39 = arith.constant dense<0.000000e+00> : vector<8x2xf32>
    %49 = tpu.matmul %3, %46, %cst_39 {dimension_numbers = #tpu.dot_dimension_numbers<[1], [0], [0], [1], [0, 0, 1, 1], [], []>} : vector<8x4xf32>, vector<4x2xf32>, vector<8x2xf32> -> vector<8x2xf32>
    %cst_40 = arith.constant dense<0.000000e+00> : vector<8x2xf32>
    %50 = tpu.matmul %4, %48, %cst_40 {dimension_numbers = #tpu.dot_dimension_numbers<[1], [0], [0], [1], [0, 0, 1, 1], [], []>} : vector<8x4xf32>, vector<4x2xf32>, vector<8x2xf32> -> vector<8x2xf32>
    %51 = arith.addf %49, %50 : vector<8x2xf32>
    %cst_41 = arith.constant 0.000000e+00 : f32
    %52 = vector.broadcast %cst_41 : f32 to vector<8x2xf32>
    %53 = arith.cmpf ogt, %51, %52 : vector<8x2xf32>
    %cst_42 = arith.constant 0.00999999977 : f32
    %54 = vector.broadcast %cst_42 : f32 to vector<8x2xf32>
    %55 = arith.mulf %54, %51 : vector<8x2xf32>
    %56 = arith.select %53, %51, %55 : vector<8x2xi1>, vector<8x2xf32>
    %cst_43 = arith.constant dense<0xFF800000> : vector<2xf32>
    %57 = vector.multi_reduction <maximumf>, %56, %cst_43 [0] : vector<8x2xf32> to vector<2xf32>
    %58 = vector.shape_cast %57 : vector<2xf32> to vector<1x2xf32>
    %59 = vector.broadcast %58 : vector<1x2xf32> to vector<8x2xf32>
    %60 = arith.subf %56, %59 : vector<8x2xf32>
    %61 = math.exp %60 : vector<8x2xf32>
    %cst_44 = arith.constant dense<0.000000e+00> : vector<2xf32>
    %62 = vector.multi_reduction <add>, %61, %cst_44 [0] : vector<8x2xf32> to vector<2xf32>
    %63 = vector.shape_cast %62 : vector<2xf32> to vector<1x2xf32>
    %64 = tpu.reciprocal %63 {approx = true} : vector<1x2xf32> -> vector<1x2xf32>
    %65 = vector.broadcast %64 : vector<1x2xf32> to vector<8x2xf32>
    %66 = arith.mulf %61, %65 : vector<8x2xf32>
    %cst_45 = arith.constant dense<0.000000e+00> : vector<8x16xf32>
    %67 = tpu.matmul %3, %44, %cst_45 {dimension_numbers = #tpu.dot_dimension_numbers<[1], [0], [0], [1], [0, 0, 1, 1], [], []>} : vector<8x4xf32>, vector<4x16xf32>, vector<8x16xf32> -> vector<8x16xf32>
    %c0_46 = arith.constant 0 : index
    %c0_47 = arith.constant 0 : index
    %68 = vector.load %arg18[%c0_46, %c0_47] : memref<2x16xf32, #tpu.memory_space<vmem>>, vector<2x16xf32>
    %cst_48 = arith.constant dense<0.000000e+00> : vector<8x16xf32>
    %69 = tpu.matmul %66, %68, %cst_48 {dimension_numbers = #tpu.dot_dimension_numbers<[1], [0], [0], [1], [0, 0, 1, 1], [], []>} : vector<8x2xf32>, vector<2x16xf32>, vector<8x16xf32> -> vector<8x16xf32>
    %70 = arith.mulf %67, %69 : vector<8x16xf32>
    %cst_49 = arith.constant dense<0.000000e+00> : vector<4x16xf32>
    %71 = tpu.matmul %5, %70, %cst_49 {dimension_numbers = #tpu.dot_dimension_numbers<[1], [0], [0], [1], [0, 0, 1, 1], [], []>} : vector<4x8xf32>, vector<8x16xf32>, vector<4x16xf32> -> vector<4x16xf32>
    %cst_50 = arith.constant 0.000000e+00 : f32
    %72 = vector.broadcast %cst_50 : f32 to vector<4x16xf32>
    %73 = arith.cmpf ogt, %71, %72 : vector<4x16xf32>
    %74 = math.exp %71 : vector<4x16xf32>
    %cst_51 = arith.constant 1.000000e+00 : f32
    %75 = vector.broadcast %cst_51 : f32 to vector<4x16xf32>
    %76 = arith.subf %74, %75 : vector<4x16xf32>
    %77 = arith.select %73, %71, %76 : vector<4x16xi1>, vector<4x16xf32>
    %c0_52 = arith.constant 0 : index
    %c0_53 = arith.constant 0 : index
    %78 = vector.load %arg25[%c0_52, %c0_53] : memref<4x16xf32, #tpu.memory_space<vmem>>, vector<4x16xf32>
    %79 = tpu.concatenate %77, %78 in 1 : vector<4x16xf32>, vector<4x16xf32> -> vector<4x32xf32>
    %c0_54 = arith.constant 0 : index
    %c0_55 = arith.constant 0 : index
    %80 = vector.load %arg19[%c0_54, %c0_55] : memref<32x64xf32, #tpu.memory_space<vmem>>, vector<32x64xf32>
    %cst_56 = arith.constant dense<0.000000e+00> : vector<4x64xf32>
    %81 = tpu.matmul %79, %80, %cst_56 {dimension_numbers = #tpu.dot_dimension_numbers<[1], [0], [0], [1], [0, 0, 1, 1], [], []>} : vector<4x32xf32>, vector<32x64xf32>, vector<4x64xf32> -> vector<4x64xf32>
    %c0_57 = arith.constant 0 : index
    %c0_58 = arith.constant 0 : index
    %82 = vector.load %arg20[%c0_57, %c0_58] : memref<1x64xf32, #tpu.memory_space<vmem>>, vector<1x64xf32>
    %83 = vector.broadcast %82 : vector<1x64xf32> to vector<4x64xf32>
    %84 = arith.addf %81, %83 : vector<4x64xf32>
    %85 = vector.extract_strided_slice %84 {offsets = [0, 0], sizes = [4, 16], strides = [1, 1]} : vector<4x64xf32> to vector<4x16xf32>
    %86 = arith.negf %85 : vector<4x16xf32>
    %87 = math.exp %86 : vector<4x16xf32>
    %cst_59 = arith.constant 1.000000e+00 : f32
    %88 = vector.broadcast %cst_59 : f32 to vector<4x16xf32>
    %89 = arith.addf %88, %87 : vector<4x16xf32>
    %90 = arith.divf %88, %89 : vector<4x16xf32>
    %91 = vector.extract_strided_slice %84 {offsets = [0, 16], sizes = [4, 16], strides = [1, 1]} : vector<4x64xf32> to vector<4x16xf32>
    %92 = arith.negf %91 : vector<4x16xf32>
    %93 = math.exp %92 : vector<4x16xf32>
    %cst_60 = arith.constant 1.000000e+00 : f32
    %94 = vector.broadcast %cst_60 : f32 to vector<4x16xf32>
    %95 = arith.addf %94, %93 : vector<4x16xf32>
    %96 = arith.divf %94, %95 : vector<4x16xf32>
    %97 = vector.extract_strided_slice %84 {offsets = [0, 32], sizes = [4, 16], strides = [1, 1]} : vector<4x64xf32> to vector<4x16xf32>
    %98 = vector.extract_strided_slice %84 {offsets = [0, 48], sizes = [4, 16], strides = [1, 1]} : vector<4x64xf32> to vector<4x16xf32>
    %99 = arith.mulf %90, %98 : vector<4x16xf32>
    %100 = arith.addf %97, %99 : vector<4x16xf32>
    %101 = math.tanh %100 : vector<4x16xf32>
    %cst_61 = arith.constant 1.000000e+00 : f32
    %102 = vector.broadcast %cst_61 : f32 to vector<4x16xf32>
    %103 = arith.subf %102, %96 : vector<4x16xf32>
    %104 = arith.mulf %103, %101 : vector<4x16xf32>
    %105 = arith.mulf %96, %78 : vector<4x16xf32>
    %106 = arith.addf %104, %105 : vector<4x16xf32>
    %c0_62 = arith.constant 0 : index
    %c0_63 = arith.constant 0 : index
    %107 = vector.load %arg25[%c0_62, %c0_63] : memref<4x16xf32, #tpu.memory_space<vmem>>, vector<4x16xf32>
    tpu.vector_store %arg25[%c0_62, %c0_63], %106 {strides = array<i32>} : memref<4x16xf32, #tpu.memory_space<vmem>>, vector<4x16xf32>,
    %c0_64 = arith.constant 0 : index
    %c0_65 = arith.constant 0 : index
    %c0_66 = arith.constant 0 : index
    %108 = vector.load %arg2[%c0_64, %c0_65, %c0_66] : memref<1x4x1xf32, #tpu.memory_space<vmem>>, vector<1x4x1xf32>
    %109 = vector.shape_cast %108 : vector<1x4x1xf32> to vector<4x1xf32>
    %c0_67 = arith.constant 0 : index
    %c0_68 = arith.constant 0 : index
    %c0_69 = arith.constant 0 : index
    %110 = vector.load %arg3[%c0_67, %c0_68, %c0_69] : memref<1x4x1xf32, #tpu.memory_space<vmem>>, vector<1x4x1xf32>
    %111 = vector.shape_cast %110 : vector<1x4x1xf32> to vector<4x1xf32>
    %c0_70 = arith.constant 0 : index
    %c0_71 = arith.constant 0 : index
    %112 = vector.load %arg21[%c0_70, %c0_71] : memref<16x10xf32, #tpu.memory_space<vmem>>, vector<16x10xf32>
    %cst_72 = arith.constant dense<0.000000e+00> : vector<4x10xf32>
    %113 = tpu.matmul %106, %112, %cst_72 {dimension_numbers = #tpu.dot_dimension_numbers<[1], [0], [0], [1], [0, 0, 1, 1], [], []>} : vector<4x16xf32>, vector<16x10xf32>, vector<4x10xf32> -> vector<4x10xf32>
    %c0_73 = arith.constant 0 : index
    %c0_74 = arith.constant 0 : index
    %114 = vector.load %arg22[%c0_73, %c0_74] : memref<2x10xf32, #tpu.memory_space<vmem>>, vector<1x10xf32>
    %115 = vector.broadcast %109 : vector<4x1xf32> to vector<4x10xf32>
    %116 = vector.broadcast %114 : vector<1x10xf32> to vector<4x10xf32>
    %117 = arith.mulf %115, %116 : vector<4x10xf32>
    %118 = arith.addf %113, %117 : vector<4x10xf32>
    %c1 = arith.constant 1 : index
    %c0_75 = arith.constant 0 : index
    %119 = vector.load %arg22[%c1, %c0_75] : memref<2x10xf32, #tpu.memory_space<vmem>>, vector<1x10xf32>
    %120 = vector.broadcast %111 : vector<4x1xf32> to vector<4x10xf32>
    %121 = vector.broadcast %119 : vector<1x10xf32> to vector<4x10xf32>
    %122 = arith.mulf %120, %121 : vector<4x10xf32>
    %123 = arith.addf %118, %122 : vector<4x10xf32>
    %c0_76 = arith.constant 0 : index
    %c0_77 = arith.constant 0 : index
    %124 = vector.load %arg23[%c0_76, %c0_77] : memref<1x10xf32, #tpu.memory_space<vmem>>, vector<1x10xf32>
    %125 = vector.broadcast %124 : vector<1x10xf32> to vector<4x10xf32>
    %126 = arith.addf %123, %125 : vector<4x10xf32>
    %127 = vector.extract_strided_slice %126 {offsets = [0, 0], sizes = [4, 4], strides = [1, 1]} : vector<4x10xf32> to vector<4x4xf32>
    %128 = vector.extract_strided_slice %126 {offsets = [0, 4], sizes = [4, 4], strides = [1, 1]} : vector<4x10xf32> to vector<4x4xf32>
    %129 = vector.extract_strided_slice %126 {offsets = [0, 8], sizes = [4, 2], strides = [1, 1]} : vector<4x10xf32> to vector<4x2xf32>
    %130 = arith.negf %129 : vector<4x2xf32>
    %131 = math.exp %130 : vector<4x2xf32>
    %cst_78 = arith.constant 1.000000e+00 : f32
    %132 = vector.broadcast %cst_78 : f32 to vector<4x2xf32>
    %133 = arith.addf %132, %131 : vector<4x2xf32>
    %134 = arith.divf %132, %133 : vector<4x2xf32>
    %135 = vector.extract_strided_slice %134 {offsets = [0, 0], sizes = [4, 1], strides = [1, 1]} : vector<4x2xf32> to vector<4x1xf32>
    %136 = vector.extract_strided_slice %134 {offsets = [0, 1], sizes = [4, 1], strides = [1, 1]} : vector<4x2xf32> to vector<4x1xf32>
    %c0_79 = arith.constant 0 : index
    %c0_80 = arith.constant 0 : index
    %c0_81 = arith.constant 0 : index
    %137 = vector.load %arg4[%c0_79, %c0_80, %c0_81] : memref<1x1x4xf32, #tpu.memory_space<vmem>>, vector<1x1x4xf32>
    %138 = vector.shape_cast %137 : vector<1x1x4xf32> to vector<1x4xf32>
    %c0_82 = arith.constant 0 : index
    %c0_83 = arith.constant 0 : index
    %c0_84 = arith.constant 0 : index
    %139 = vector.load %arg5[%c0_82, %c0_83, %c0_84] : memref<1x1x4xf32, #tpu.memory_space<vmem>>, vector<1x1x4xf32>
    %140 = vector.shape_cast %139 : vector<1x1x4xf32> to vector<1x4xf32>
    %c0_85 = arith.constant 0 : index
    %c0_86 = arith.constant 0 : index
    %141 = vector.load %arg6[%c0_85, %c0_86] : memref<1x4xf32, #tpu.memory_space<vmem>>, vector<1x4xf32>
    %142 = arith.subf %141, %138 : vector<1x4xf32>
    %143 = arith.subf %142, %140 : vector<1x4xf32>
    %cst_87 = arith.constant 0.000000e+00 : f32
    %144 = vector.broadcast %cst_87 : f32 to vector<1x4xf32>
    %145 = arith.maximumf %143, %144 : vector<1x4xf32>
    %146 = arith.mulf %138, %145 : vector<1x4xf32>
    %147 = tpu.reciprocal %141 {approx = true} : vector<1x4xf32> -> vector<1x4xf32>
    %148 = arith.mulf %146, %147 : vector<1x4xf32>
    %149 = vector.broadcast %135 : vector<4x1xf32> to vector<4x4xf32>
    %150 = vector.broadcast %148 : vector<1x4xf32> to vector<4x4xf32>
    %151 = arith.mulf %149, %150 : vector<4x4xf32>
    %152 = vector.broadcast %136 : vector<4x1xf32> to vector<4x4xf32>
    %153 = vector.broadcast %138 : vector<1x4xf32> to vector<4x4xf32>
    %154 = arith.mulf %152, %153 : vector<4x4xf32>
    %155 = arith.subf %151, %154 : vector<4x4xf32>
    %156 = vector.broadcast %136 : vector<4x1xf32> to vector<4x4xf32>
    %157 = vector.broadcast %138 : vector<1x4xf32> to vector<4x4xf32>
    %158 = arith.mulf %156, %157 : vector<4x4xf32>
    %cst_88 = arith.constant 0.000000e+00 : f32
    %159 = vector.broadcast %cst_88 : f32 to vector<4x96xf32>
    %160 = tpu.concatenate %127, %128, %155, %158, %106, %159 in 1 : vector<4x4xf32>, vector<4x4xf32>, vector<4x4xf32>, vector<4x4xf32>, vector<4x16xf32>, vector<4x96xf32> -> vector<4x128xf32>
    %c0_89 = arith.constant 0 : index
    %c0_90 = arith.constant 0 : index
    %c0_91 = arith.constant 0 : index
    %161 = vector.load %arg24[%c0_89, %c0_90, %c0_91] : memref<1x4x128xf32, #tpu.memory_space<vmem>>, vector<1x4x128xf32>
    %162 = vector.shape_cast %161 : vector<1x4x128xf32> to vector<4x128xf32>
    %163 = vector.shape_cast %160 : vector<4x128xf32> to vector<1x4x128xf32>
    tpu.vector_store %arg24[%c0_89, %c0_90, %c0_91], %163 {strides = array<i32>} : memref<1x4x128xf32, #tpu.memory_space<vmem>>, vector<1x4x128xf32>,
    return
  }
  func.func @transform_0(%arg0: i32) -> (i32, i32, i32) {
    %c0_i32 = arith.constant 0 : i32
    %c0_i32_0 = arith.constant 0 : i32
    %c0_i32_1 = arith.constant 0 : i32
    return %arg0, %c0_i32, %c0_i32_0 : i32, i32, i32
  }
  func.func @transform_1(%arg0: i32) -> (i32, i32, i32) {
    %c0_i32 = arith.constant 0 : i32
    %c0_i32_0 = arith.constant 0 : i32
    %c0_i32_1 = arith.constant 0 : i32
    return %arg0, %c0_i32, %c0_i32_0 : i32, i32, i32
  }
  func.func @transform_2(%arg0: i32) -> (i32, i32, i32) {
    %c0_i32 = arith.constant 0 : i32
    %c0_i32_0 = arith.constant 0 : i32
    %c0_i32_1 = arith.constant 0 : i32
    return %arg0, %c0_i32, %c0_i32_0 : i32, i32, i32
  }
  func.func @transform_3(%arg0: i32) -> (i32, i32, i32) {
    %c0_i32 = arith.constant 0 : i32
    %c0_i32_0 = arith.constant 0 : i32
    %c0_i32_1 = arith.constant 0 : i32
    return %arg0, %c0_i32, %c0_i32_0 : i32, i32, i32
  }
  func.func @transform_4(%arg0: i32) -> (i32, i32, i32) {
    %c0_i32 = arith.constant 0 : i32
    %c0_i32_0 = arith.constant 0 : i32
    %c0_i32_1 = arith.constant 0 : i32
    return %arg0, %c0_i32, %c0_i32_0 : i32, i32, i32
  }
  func.func @transform_5(%arg0: i32) -> (i32, i32) {
    %c0_i32 = arith.constant 0 : i32
    %c0_i32_0 = arith.constant 0 : i32
    %c0_i32_1 = arith.constant 0 : i32
    return %c0_i32, %c0_i32_0 : i32, i32
  }
  func.func @transform_6(%arg0: i32) -> (i32, i32) {
    %c0_i32 = arith.constant 0 : i32
    %c0_i32_0 = arith.constant 0 : i32
    %c0_i32_1 = arith.constant 0 : i32
    return %c0_i32, %c0_i32_0 : i32, i32
  }
  func.func @transform_7(%arg0: i32) -> (i32, i32) {
    %c0_i32 = arith.constant 0 : i32
    %c0_i32_0 = arith.constant 0 : i32
    %c0_i32_1 = arith.constant 0 : i32
    return %c0_i32, %c0_i32_0 : i32, i32
  }
  func.func @transform_8(%arg0: i32) -> (i32, i32) {
    %c0_i32 = arith.constant 0 : i32
    %c0_i32_0 = arith.constant 0 : i32
    %c0_i32_1 = arith.constant 0 : i32
    return %c0_i32, %c0_i32_0 : i32, i32
  }
  func.func @transform_9(%arg0: i32) -> (i32, i32) {
    %c0_i32 = arith.constant 0 : i32
    %c0_i32_0 = arith.constant 0 : i32
    %c0_i32_1 = arith.constant 0 : i32
    return %c0_i32, %c0_i32_0 : i32, i32
  }
  func.func @transform_10(%arg0: i32) -> (i32, i32) {
    %c0_i32 = arith.constant 0 : i32
    %c0_i32_0 = arith.constant 0 : i32
    %c0_i32_1 = arith.constant 0 : i32
    return %c0_i32, %c0_i32_0 : i32, i32
  }
  func.func @transform_11(%arg0: i32) -> (i32, i32) {
    %c0_i32 = arith.constant 0 : i32
    %c0_i32_0 = arith.constant 0 : i32
    %c0_i32_1 = arith.constant 0 : i32
    return %c0_i32, %c0_i32_0 : i32, i32
  }
  func.func @transform_12(%arg0: i32) -> (i32, i32) {
    %c0_i32 = arith.constant 0 : i32
    %c0_i32_0 = arith.constant 0 : i32
    %c0_i32_1 = arith.constant 0 : i32
    return %c0_i32, %c0_i32_0 : i32, i32
  }
  func.func @transform_13(%arg0: i32) -> (i32, i32) {
    %c0_i32 = arith.constant 0 : i32
    %c0_i32_0 = arith.constant 0 : i32
    %c0_i32_1 = arith.constant 0 : i32
    return %c0_i32, %c0_i32_0 : i32, i32
  }
  func.func @transform_14(%arg0: i32) -> (i32, i32) {
    %c0_i32 = arith.constant 0 : i32
    %c0_i32_0 = arith.constant 0 : i32
    %c0_i32_1 = arith.constant 0 : i32
    return %c0_i32, %c0_i32_0 : i32, i32
  }
  func.func @transform_15(%arg0: i32) -> (i32, i32) {
    %c0_i32 = arith.constant 0 : i32
    %c0_i32_0 = arith.constant 0 : i32
    %c0_i32_1 = arith.constant 0 : i32
    return %c0_i32, %c0_i32_0 : i32, i32
  }
  func.func @transform_16(%arg0: i32) -> (i32, i32) {
    %c0_i32 = arith.constant 0 : i32
    %c0_i32_0 = arith.constant 0 : i32
    %c0_i32_1 = arith.constant 0 : i32
    return %c0_i32, %c0_i32_0 : i32, i32
  }
  func.func @transform_17(%arg0: i32) -> (i32, i32) {
    %c0_i32 = arith.constant 0 : i32
    %c0_i32_0 = arith.constant 0 : i32
    %c0_i32_1 = arith.constant 0 : i32
    return %c0_i32, %c0_i32_0 : i32, i32
  }
  func.func @transform_18(%arg0: i32) -> (i32, i32) {
    %c0_i32 = arith.constant 0 : i32
    %c0_i32_0 = arith.constant 0 : i32
    %c0_i32_1 = arith.constant 0 : i32
    return %c0_i32, %c0_i32_0 : i32, i32
  }
  func.func @transform_19(%arg0: i32) -> (i32, i32) {
    %c0_i32 = arith.constant 0 : i32
    %c0_i32_0 = arith.constant 0 : i32
    %c0_i32_1 = arith.constant 0 : i32
    return %c0_i32, %c0_i32_0 : i32, i32
  }
  func.func @transform_20(%arg0: i32) -> (i32, i32) {
    %c0_i32 = arith.constant 0 : i32
    %c0_i32_0 = arith.constant 0 : i32
    %c0_i32_1 = arith.constant 0 : i32
    return %c0_i32, %c0_i32_0 : i32, i32
  }
  func.func @transform_21(%arg0: i32) -> (i32, i32) {
    %c0_i32 = arith.constant 0 : i32
    %c0_i32_0 = arith.constant 0 : i32
    %c0_i32_1 = arith.constant 0 : i32
    return %c0_i32, %c0_i32_0 : i32, i32
  }
  func.func @transform_22(%arg0: i32) -> (i32, i32) {
    %c0_i32 = arith.constant 0 : i32
    %c0_i32_0 = arith.constant 0 : i32
    %c0_i32_1 = arith.constant 0 : i32
    return %c0_i32, %c0_i32_0 : i32, i32
  }
  func.func @transform_23(%arg0: i32) -> (i32, i32, i32) {
    %c0_i32 = arith.constant 0 : i32
    %c0_i32_0 = arith.constant 0 : i32
    %c0_i32_1 = arith.constant 0 : i32
    return %arg0, %c0_i32, %c0_i32_0 : i32, i32, i32
  }
}

</mosaic_0001>

<llo_original>
// kernel: tpu_custom_call.1
$region0: #{tpu_custom_call.1}
  #allocation0 [shape = 'u32[]', space=smem, size = 0x4, offset = 0x4, fixed_abs, tag = 'smem constant byte address 0x4 - core index']
  #allocation1 [shape = 'u32[72,128]{1,0:T(1,128)}', space=vmem, size = 0x9000, scoped, tag = 'internal scratch']
  #allocation2 [shape = 'f32[4,16]{1,0:T(4,128)}', space=vmem, size = 0x800, scoped, tag = 'scratch operand']
  %s0 = inlined_call_operand.vmem [shape: f32[5,4,8], index: 0, kind: input, shape index: {}]
  %s1 = inlined_call_operand.vmem [shape: f32[5,4,1], index: 1, kind: input, shape index: {}]
  %s2 = inlined_call_operand.vmem [shape: f32[5,4,1], index: 2, kind: input, shape index: {}]
  %s3 = inlined_call_operand.vmem [shape: f32[5,1,4], index: 3, kind: input, shape index: {}]
  %s4 = inlined_call_operand.vmem [shape: f32[5,1,4], index: 4, kind: input, shape index: {}]
  %s5 = inlined_call_operand.vmem [shape: f32[1,4], index: 5, kind: input, shape index: {}]
  %s6 = inlined_call_operand.vmem [shape: f32[4,16], index: 6, kind: input, shape index: {}]
  %s7 = inlined_call_operand.vmem [shape: f32[8,4], index: 7, kind: input, shape index: {}]
  %s8 = inlined_call_operand.vmem [shape: f32[8,4], index: 8, kind: input, shape index: {}]
  %s9 = inlined_call_operand.vmem [shape: f32[4,8], index: 9, kind: input, shape index: {}]
  %s10 = inlined_call_operand.vmem [shape: f32[8,16], index: 10, kind: input, shape index: {}]
  %s11 = inlined_call_operand.vmem [shape: f32[8,2], index: 11, kind: input, shape index: {}]
  %s12 = inlined_call_operand.vmem [shape: f32[8,2], index: 12, kind: input, shape index: {}]
  %s13 = inlined_call_operand.vmem [shape: f32[2,16], index: 13, kind: input, shape index: {}]
  %s14 = inlined_call_operand.vmem [shape: f32[16,16], index: 14, kind: input, shape index: {}]
  %s15 = inlined_call_operand.vmem [shape: f32[16,2], index: 15, kind: input, shape index: {}]
  %s16 = inlined_call_operand.vmem [shape: f32[16,2], index: 16, kind: input, shape index: {}]
  %s17 = inlined_call_operand.vmem [shape: f32[2,16], index: 17, kind: input, shape index: {}]
  %s18 = inlined_call_operand.vmem [shape: f32[32,64], index: 18, kind: input, shape index: {}]
  %s19 = inlined_call_operand.vmem [shape: f32[1,64], index: 19, kind: input, shape index: {}]
  %s20 = inlined_call_operand.vmem [shape: f32[16,10], index: 20, kind: input, shape index: {}]
  %s21 = inlined_call_operand.vmem [shape: f32[2,10], index: 21, kind: input, shape index: {}]
  %s22 = inlined_call_operand.vmem [shape: f32[1,10], index: 22, kind: input, shape index: {}]
  %s23 = inlined_call_operand.hbm [shape: f32[5,4,128], index: 23, kind: output, shape index: {}]
  %s24 = sld [smem:[#allocation0]]
  $region129: #{tpu_custom_call.1} parent=0
    _
  %s26 = ssub.s32 1, %s24
  %s27 = scalar_select 0, %s26, %s24
  $region1: #{tpu_custom_call.1} parent=0
    #allocation3 [shape = 'u8[4096]{0}', space=vmem, size = 0x1000, scoped, tag = 'output window, operand 0']
    #allocation4 [shape = 's32[2]{0}', space=sflag, size = 0x8, scoped, tag = 'scoped memory for tpu_custom_call.1']
    %28 = vsyncpa [#allocation4], 0
    %s29 = scalar_lea.sflag [#allocation4], 1
    %30 = vsyncpa %s29, 0
    loop: start=0, step=1, limit=7
    $region2: #{tpu_custom_call.1} parent=1 // loop_pre_header
      _
    $region3: #{tpu_custom_call.1} parent=1 // loop_header
      %s32 = sphi 0, %s36
      %p33 = scmp.ge.s32.totalorder %s32, 7
      %s42 = sphi 0, %s44
      %s45 = sphi 0, %s42
      %s46 = sphi 0, %s45
      %s62 = sphi 0, %s46
      %s68 = sphi 0, %s70
      %s71 = sphi 0, %s68
      %s72 = sphi 0, %s71
      %s88 = sphi 0, %s72
      %s94 = sphi 0, %s96
      %s97 = sphi 0, %s94
      %s98 = sphi 0, %s97
      %s114 = sphi 0, %s98
      %s120 = sphi 0, %s122
      %s123 = sphi 0, %s120
      %s124 = sphi 0, %s123
      %s140 = sphi 0, %s124
      %s146 = sphi 0, %s148
      %s149 = sphi 0, %s146
      %s150 = sphi 0, %s149
      %s166 = sphi 0, %s150
      %s170 = sphi 0, %s170
      %s172 = sphi 0, %s170
      %s173 = sphi 0, %s172
      %s187 = sphi 0, %s173
      %s191 = sphi 0, %s191
      %s193 = sphi 0, %s191
      %s194 = sphi 0, %s193
      %s208 = sphi 0, %s194
      %s212 = sphi 0, %s212
      %s214 = sphi 0, %s212
      %s215 = sphi 0, %s214
      %s229 = sphi 0, %s215
      %s233 = sphi 0, %s233
      %s235 = sphi 0, %s233
      %s236 = sphi 0, %s235
      %s250 = sphi 0, %s236
      %s254 = sphi 0, %s254
      %s256 = sphi 0, %s254
      %s257 = sphi 0, %s256
      %s271 = sphi 0, %s257
      %s275 = sphi 0, %s275
      %s277 = sphi 0, %s275
      %s278 = sphi 0, %s277
      %s292 = sphi 0, %s278
      %s296 = sphi 0, %s296
      %s298 = sphi 0, %s296
      %s299 = sphi 0, %s298
      %s313 = sphi 0, %s299
      %s317 = sphi 0, %s317
      %s319 = sphi 0, %s317
      %s320 = sphi 0, %s319
      %s334 = sphi 0, %s320
      %s338 = sphi 0, %s338
      %s340 = sphi 0, %s338
      %s341 = sphi 0, %s340
      %s355 = sphi 0, %s341
      %s359 = sphi 0, %s359
      %s361 = sphi 0, %s359
      %s362 = sphi 0, %s361
      %s376 = sphi 0, %s362
      %s380 = sphi 0, %s380
      %s382 = sphi 0, %s380
      %s383 = sphi 0, %s382
      %s397 = sphi 0, %s383
      %s401 = sphi 0, %s401
      %s403 = sphi 0, %s401
      %s404 = sphi 0, %s403
      %s418 = sphi 0, %s404
      %s422 = sphi 0, %s422
      %s424 = sphi 0, %s422
      %s425 = sphi 0, %s424
      %s439 = sphi 0, %s425
      %s443 = sphi 0, %s443
      %s445 = sphi 0, %s443
      %s446 = sphi 0, %s445
      %s460 = sphi 0, %s446
      %s464 = sphi 0, %s464
      %s466 = sphi 0, %s464
      %s467 = sphi 0, %s466
      %s481 = sphi 0, %s467
      %s485 = sphi 0, %s485
      %s487 = sphi 0, %s485
      %s488 = sphi 0, %s487
      %s502 = sphi 0, %s488
      %s506 = sphi 0, %s506
      %s508 = sphi 0, %s506
      %s509 = sphi 0, %s508
      %s523 = sphi 0, %s509
      %s527 = sphi 0, %s527
      %s529 = sphi 0, %s527
      %s530 = sphi 0, %s529
      %s544 = sphi 0, %s530
      %s550 = sphi 0, %s552
      %s553 = sphi 0, %s550
      %s554 = sphi 0, %s553
      %s570 = sphi 0, %s554
    $region4: #{tpu_custom_call.1} parent=1 // loop_header_branch
      %35 = sbr.rel (%p33) target = $region8
    $region5: #{tpu_custom_call.1} parent=1 // loop_body
      %s37 = ssub.s32 %s32, 1
      %s38 = ssub.s32 %s32, 2
      %s39 = sadd.s32 %s32, 1
      %s40 = ssub.s32 %s32, %s39
      %p41 = scmp.eq.s32.totalorder %s40, 0
      %s43 = sadd.s32 %s42, 1
      %s44 = scalar_select %p41, %s42, %s43
      %p47 = pneg %p41
      %p48 = scmp.eq.s32.totalorder %s32, 4
      %p49 = por %p47, %p48
      %p50 = scmp.ne.s32.totalorder %s42, %s45
      %p51 = scmp.eq.s32.totalorder %s32, 0
      %p52 = por %p50, %p51
      %p53 = scmp.ne.s32.totalorder %s42, %s45
      %p54 = scmp.eq.s32.totalorder %s37, 4
      %p55 = por %p53, %p54
      %p56 = scmp.ne.s32.totalorder %s45, %s46
      %p57 = scmp.eq.s32.totalorder %s37, 0
      %p58 = por %p56, %p57
      %p59 = scmp.ne.s32.totalorder %s45, %s46
      %p60 = scmp.eq.s32.totalorder %s38, 4
      %p61 = por %p59, %p60
      %p63 = scmp.ne.s32.totalorder %s46, %s62
      %p64 = scmp.eq.s32.totalorder %s38, 0
      %p65 = por %p63, %p64
      %s66 = ssub.s32 %s32, %s39
      %p67 = scmp.eq.s32.totalorder %s66, 0
      %s69 = sadd.s32 %s68, 1
      %s70 = scalar_select %p67, %s68, %s69
      %p73 = pneg %p67
      %p74 = scmp.eq.s32.totalorder %s32, 4
      %p75 = por %p73, %p74
      %p76 = scmp.ne.s32.totalorder %s68, %s71
      %p77 = scmp.eq.s32.totalorder %s32, 0
      %p78 = por %p76, %p77
      %p79 = scmp.ne.s32.totalorder %s68, %s71
      %p80 = scmp.eq.s32.totalorder %s37, 4
      %p81 = por %p79, %p80
      %p82 = scmp.ne.s32.totalorder %s71, %s72
      %p83 = scmp.eq.s32.totalorder %s37, 0
      %p84 = por %p82, %p83
      %p85 = scmp.ne.s32.totalorder %s71, %s72
      %p86 = scmp.eq.s32.totalorder %s38, 4
      %p87 = por %p85, %p86
      %p89 = scmp.ne.s32.totalorder %s72, %s88
      %p90 = scmp.eq.s32.totalorder %s38, 0
      %p91 = por %p89, %p90
      %s92 = ssub.s32 %s32, %s39
      %p93 = scmp.eq.s32.totalorder %s92, 0
      %s95 = sadd.s32 %s94, 1
      %s96 = scalar_select %p93, %s94, %s95
      %p99 = pneg %p93
      %p100 = scmp.eq.s32.totalorder %s32, 4
      %p101 = por %p99, %p100
      %p102 = scmp.ne.s32.totalorder %s94, %s97
      %p103 = scmp.eq.s32.totalorder %s32, 0
      %p104 = por %p102, %p103
      %p105 = scmp.ne.s32.totalorder %s94, %s97
      %p106 = scmp.eq.s32.totalorder %s37, 4
      %p107 = por %p105, %p106
      %p108 = scmp.ne.s32.totalorder %s97, %s98
      %p109 = scmp.eq.s32.totalorder %s37, 0
      %p110 = por %p108, %p109
      %p111 = scmp.ne.s32.totalorder %s97, %s98
      %p112 = scmp.eq.s32.totalorder %s38, 4
      %p113 = por %p111, %p112
      %p115 = scmp.ne.s32.totalorder %s98, %s114
      %p116 = scmp.eq.s32.totalorder %s38, 0
      %p117 = por %p115, %p116
      %s118 = ssub.s32 %s32, %s39
      %p119 = scmp.eq.s32.totalorder %s118, 0
      %s121 = sadd.s32 %s120, 1
      %s122 = scalar_select %p119, %s120, %s121
      %p125 = pneg %p119
      %p126 = scmp.eq.s32.totalorder %s32, 4
      %p127 = por %p125, %p126
      %p128 = scmp.ne.s32.totalorder %s120, %s123
      %p129 = scmp.eq.s32.totalorder %s32, 0
      %p130 = por %p128, %p129
      %p131 = scmp.ne.s32.totalorder %s120, %s123
      %p132 = scmp.eq.s32.totalorder %s37, 4
      %p133 = por %p131, %p132
      %p134 = scmp.ne.s32.totalorder %s123, %s124
      %p135 = scmp.eq.s32.totalorder %s37, 0
      %p136 = por %p134, %p135
      %p137 = scmp.ne.s32.totalorder %s123, %s124
      %p138 = scmp.eq.s32.totalorder %s38, 4
      %p139 = por %p137, %p138
      %p141 = scmp.ne.s32.totalorder %s124, %s140
      %p142 = scmp.eq.s32.totalorder %s38, 0
      %p143 = por %p141, %p142
      %s144 = ssub.s32 %s32, %s39
      %p145 = scmp.eq.s32.totalorder %s144, 0
      %s147 = sadd.s32 %s146, 1
      %s148 = scalar_select %p145, %s146, %s147
      %p151 = pneg %p145
      %p152 = scmp.eq.s32.totalorder %s32, 4
      %p153 = por %p151, %p152
      %p154 = scmp.ne.s32.totalorder %s146, %s149
      %p155 = scmp.eq.s32.totalorder %s32, 0
      %p156 = por %p154, %p155
      %p157 = scmp.ne.s32.totalorder %s146, %s149
      %p158 = scmp.eq.s32.totalorder %s37, 4
      %p159 = por %p157, %p158
      %p160 = scmp.ne.s32.totalorder %s149, %s150
      %p161 = scmp.eq.s32.totalorder %s37, 0
      %p162 = por %p160, %p161
      %p163 = scmp.ne.s32.totalorder %s149, %s150
      %p164 = scmp.eq.s32.totalorder %s38, 4
      %p165 = por %p163, %p164
      %p167 = scmp.ne.s32.totalorder %s150, %s166
      %p168 = scmp.eq.s32.totalorder %s38, 0
      %p169 = por %p167, %p168
      %s171 = sadd.s32 %s170, 1
      %p174 = scmp.eq.s32.totalorder %s32, 4
      %p175 = scmp.ne.s32.totalorder %s170, %s172
      %p176 = scmp.eq.s32.totalorder %s32, 0
      %p177 = por %p175, %p176
      %p178 = scmp.ne.s32.totalorder %s170, %s172
      %p179 = scmp.eq.s32.totalorder %s37, 4
      %p180 = por %p178, %p179
      %p181 = scmp.ne.s32.totalorder %s172, %s173
      %p182 = scmp.eq.s32.totalorder %s37, 0
      %p183 = por %p181, %p182
      %p184 = scmp.ne.s32.totalorder %s172, %s173
      %p185 = scmp.eq.s32.totalorder %s38, 4
      %p186 = por %p184, %p185
      %p188 = scmp.ne.s32.totalorder %s173, %s187
      %p189 = scmp.eq.s32.totalorder %s38, 0
      %p190 = por %p188, %p189
      %s192 = sadd.s32 %s191, 1
      %p195 = scmp.eq.s32.totalorder %s32, 4
      %p196 = scmp.ne.s32.totalorder %s191, %s193
      %p197 = scmp.eq.s32.totalorder %s32, 0
      %p198 = por %p196, %p197
      %p199 = scmp.ne.s32.totalorder %s191, %s193
      %p200 = scmp.eq.s32.totalorder %s37, 4
      %p201 = por %p199, %p200
      %p202 = scmp.ne.s32.totalorder %s193, %s194
      %p203 = scmp.eq.s32.totalorder %s37, 0
      %p204 = por %p202, %p203
      %p205 = scmp.ne.s32.totalorder %s193, %s194
      %p206 = scmp.eq.s32.totalorder %s38, 4
      %p207 = por %p205, %p206
      %p209 = scmp.ne.s32.totalorder %s194, %s208
      %p210 = scmp.eq.s32.totalorder %s38, 0
      %p211 = por %p209, %p210
      %s213 = sadd.s32 %s212, 1
      %p216 = scmp.eq.s32.totalorder %s32, 4
      %p217 = scmp.ne.s32.totalorder %s212, %s214
      %p218 = scmp.eq.s32.totalorder %s32, 0
      %p219 = por %p217, %p218
      %p220 = scmp.ne.s32.totalorder %s212, %s214
      %p221 = scmp.eq.s32.totalorder %s37, 4
      %p222 = por %p220, %p221
      %p223 = scmp.ne.s32.totalorder %s214, %s215
      %p224 = scmp.eq.s32.totalorder %s37, 0
      %p225 = por %p223, %p224
      %p226 = scmp.ne.s32.totalorder %s214, %s215
      %p227 = scmp.eq.s32.totalorder %s38, 4
      %p228 = por %p226, %p227
      %p230 = scmp.ne.s32.totalorder %s215, %s229
      %p231 = scmp.eq.s32.totalorder %s38, 0
      %p232 = por %p230, %p231
      %s234 = sadd.s32 %s233, 1
      %p237 = scmp.eq.s32.totalorder %s32, 4
      %p238 = scmp.ne.s32.totalorder %s233, %s235
      %p239 = scmp.eq.s32.totalorder %s32, 0
      %p240 = por %p238, %p239
      %p241 = scmp.ne.s32.totalorder %s233, %s235
      %p242 = scmp.eq.s32.totalorder %s37, 4
      %p243 = por %p241, %p242
      %p244 = scmp.ne.s32.totalorder %s235, %s236
      %p245 = scmp.eq.s32.totalorder %s37, 0
      %p246 = por %p244, %p245
      %p247 = scmp.ne.s32.totalorder %s235, %s236
      %p248 = scmp.eq.s32.totalorder %s38, 4
      %p249 = por %p247, %p248
      %p251 = scmp.ne.s32.totalorder %s236, %s250
      %p252 = scmp.eq.s32.totalorder %s38, 0
      %p253 = por %p251, %p252
      %s255 = sadd.s32 %s254, 1
      %p258 = scmp.eq.s32.totalorder %s32, 4
      %p259 = scmp.ne.s32.totalorder %s254, %s256
      %p260 = scmp.eq.s32.totalorder %s32, 0
      %p261 = por %p259, %p260
      %p262 = scmp.ne.s32.totalorder %s254, %s256
      %p263 = scmp.eq.s32.totalorder %s37, 4
      %p264 = por %p262, %p263
      %p265 = scmp.ne.s32.totalorder %s256, %s257
      %p266 = scmp.eq.s32.totalorder %s37, 0
      %p267 = por %p265, %p266
      %p268 = scmp.ne.s32.totalorder %s256, %s257
      %p269 = scmp.eq.s32.totalorder %s38, 4
      %p270 = por %p268, %p269
      %p272 = scmp.ne.s32.totalorder %s257, %s271
      %p273 = scmp.eq.s32.totalorder %s38, 0
      %p274 = por %p272, %p273
      %s276 = sadd.s32 %s275, 1
      %p279 = scmp.eq.s32.totalorder %s32, 4
      %p280 = scmp.ne.s32.totalorder %s275, %s277
      %p281 = scmp.eq.s32.totalorder %s32, 0
      %p282 = por %p280, %p281
      %p283 = scmp.ne.s32.totalorder %s275, %s277
      %p284 = scmp.eq.s32.totalorder %s37, 4
      %p285 = por %p283, %p284
      %p286 = scmp.ne.s32.totalorder %s277, %s278
      %p287 = scmp.eq.s32.totalorder %s37, 0
      %p288 = por %p286, %p287
      %p289 = scmp.ne.s32.totalorder %s277, %s278
      %p290 = scmp.eq.s32.totalorder %s38, 4
      %p291 = por %p289, %p290
      %p293 = scmp.ne.s32.totalorder %s278, %s292
      %p294 = scmp.eq.s32.totalorder %s38, 0
      %p295 = por %p293, %p294
      %s297 = sadd.s32 %s296, 1
      %p300 = scmp.eq.s32.totalorder %s32, 4
      %p301 = scmp.ne.s32.totalorder %s296, %s298
      %p302 = scmp.eq.s32.totalorder %s32, 0
      %p303 = por %p301, %p302
      %p304 = scmp.ne.s32.totalorder %s296, %s298
      %p305 = scmp.eq.s32.totalorder %s37, 4
      %p306 = por %p304, %p305
      %p307 = scmp.ne.s32.totalorder %s298, %s299
      %p308 = scmp.eq.s32.totalorder %s37, 0
      %p309 = por %p307, %p308
      %p310 = scmp.ne.s32.totalorder %s298, %s299
      %p311 = scmp.eq.s32.totalorder %s38, 4
      %p312 = por %p310, %p311
      %p314 = scmp.ne.s32.totalorder %s299, %s313
      %p315 = scmp.eq.s32.totalorder %s38, 0
      %p316 = por %p314, %p315
      %s318 = sadd.s32 %s317, 1
      %p321 = scmp.eq.s32.totalorder %s32, 4
      %p322 = scmp.ne.s32.totalorder %s317, %s319
      %p323 = scmp.eq.s32.totalorder %s32, 0
      %p324 = por %p322, %p323
      %p325 = scmp.ne.s32.totalorder %s317, %s319
      %p326 = scmp.eq.s32.totalorder %s37, 4
      %p327 = por %p325, %p326
      %p328 = scmp.ne.s32.totalorder %s319, %s320
      %p329 = scmp.eq.s32.totalorder %s37, 0
      %p330 = por %p328, %p329
      %p331 = scmp.ne.s32.totalorder %s319, %s320
      %p332 = scmp.eq.s32.totalorder %s38, 4
      %p333 = por %p331, %p332
      %p335 = scmp.ne.s32.totalorder %s320, %s334
      %p336 = scmp.eq.s32.totalorder %s38, 0
      %p337 = por %p335, %p336
      %s339 = sadd.s32 %s338, 1
      %p342 = scmp.eq.s32.totalorder %s32, 4
      %p343 = scmp.ne.s32.totalorder %s338, %s340
      %p344 = scmp.eq.s32.totalorder %s32, 0
      %p345 = por %p343, %p344
      %p346 = scmp.ne.s32.totalorder %s338, %s340
      %p347 = scmp.eq.s32.totalorder %s37, 4
      %p348 = por %p346, %p347
      %p349 = scmp.ne.s32.totalorder %s340, %s341
      %p350 = scmp.eq.s32.totalorder %s37, 0
      %p351 = por %p349, %p350
      %p352 = scmp.ne.s32.totalorder %s340, %s341
      %p353 = scmp.eq.s32.totalorder %s38, 4
      %p354 = por %p352, %p353
      %p356 = scmp.ne.s32.totalorder %s341, %s355
      %p357 = scmp.eq.s32.totalorder %s38, 0
      %p358 = por %p356, %p357
      %s360 = sadd.s32 %s359, 1
      %p363 = scmp.eq.s32.totalorder %s32, 4
      %p364 = scmp.ne.s32.totalorder %s359, %s361
      %p365 = scmp.eq.s32.totalorder %s32, 0
      %p366 = por %p364, %p365
      %p367 = scmp.ne.s32.totalorder %s359, %s361
      %p368 = scmp.eq.s32.totalorder %s37, 4
      %p369 = por %p367, %p368
      %p370 = scmp.ne.s32.totalorder %s361, %s362
      %p371 = scmp.eq.s32.totalorder %s37, 0
      %p372 = por %p370, %p371
      %p373 = scmp.ne.s32.totalorder %s361, %s362
      %p374 = scmp.eq.s32.totalorder %s38, 4
      %p375 = por %p373, %p374
      %p377 = scmp.ne.s32.totalorder %s362, %s376
      %p378 = scmp.eq.s32.totalorder %s38, 0
      %p379 = por %p377, %p378
      %s381 = sadd.s32 %s380, 1
      %p384 = scmp.eq.s32.totalorder %s32, 4
      %p385 = scmp.ne.s32.totalorder %s380, %s382
      %p386 = scmp.eq.s32.totalorder %s32, 0
      %p387 = por %p385, %p386
      %p388 = scmp.ne.s32.totalorder %s380, %s382
      %p389 = scmp.eq.s32.totalorder %s37, 4
      %p390 = por %p388, %p389
      %p391 = scmp.ne.s32.totalorder %s382, %s383
      %p392 = scmp.eq.s32.totalorder %s37, 0
      %p393 = por %p391, %p392
      %p394 = scmp.ne.s32.totalorder %s382, %s383
      %p395 = scmp.eq.s32.totalorder %s38, 4
      %p396 = por %p394, %p395
      %p398 = scmp.ne.s32.totalorder %s383, %s397
      %p399 = scmp.eq.s32.totalorder %s38, 0
      %p400 = por %p398, %p399
      %s402 = sadd.s32 %s401, 1
      %p405 = scmp.eq.s32.totalorder %s32, 4
      %p406 = scmp.ne.s32.totalorder %s401, %s403
      %p407 = scmp.eq.s32.totalorder %s32, 0
      %p408 = por %p406, %p407
      %p409 = scmp.ne.s32.totalorder %s401, %s403
      %p410 = scmp.eq.s32.totalorder %s37, 4
      %p411 = por %p409, %p410
      %p412 = scmp.ne.s32.totalorder %s403, %s404
      %p413 = scmp.eq.s32.totalorder %s37, 0
      %p414 = por %p412, %p413
      %p415 = scmp.ne.s32.totalorder %s403, %s404
      %p416 = scmp.eq.s32.totalorder %s38, 4
      %p417 = por %p415, %p416
      %p419 = scmp.ne.s32.totalorder %s404, %s418
      %p420 = scmp.eq.s32.totalorder %s38, 0
      %p421 = por %p419, %p420
      %s423 = sadd.s32 %s422, 1
      %p426 = scmp.eq.s32.totalorder %s32, 4
      %p427 = scmp.ne.s32.totalorder %s422, %s424
      %p428 = scmp.eq.s32.totalorder %s32, 0
      %p429 = por %p427, %p428
      %p430 = scmp.ne.s32.totalorder %s422, %s424
      %p431 = scmp.eq.s32.totalorder %s37, 4
      %p432 = por %p430, %p431
      %p433 = scmp.ne.s32.totalorder %s424, %s425
      %p434 = scmp.eq.s32.totalorder %s37, 0
      %p435 = por %p433, %p434
      %p436 = scmp.ne.s32.totalorder %s424, %s425
      %p437 = scmp.eq.s32.totalorder %s38, 4
      %p438 = por %p436, %p437
      %p440 = scmp.ne.s32.totalorder %s425, %s439
      %p441 = scmp.eq.s32.totalorder %s38, 0
      %p442 = por %p440, %p441
      %s444 = sadd.s32 %s443, 1
      %p447 = scmp.eq.s32.totalorder %s32, 4
      %p448 = scmp.ne.s32.totalorder %s443, %s445
      %p449 = scmp.eq.s32.totalorder %s32, 0
      %p450 = por %p448, %p449
      %p451 = scmp.ne.s32.totalorder %s443, %s445
      %p452 = scmp.eq.s32.totalorder %s37, 4
      %p453 = por %p451, %p452
      %p454 = scmp.ne.s32.totalorder %s445, %s446
      %p455 = scmp.eq.s32.totalorder %s37, 0
      %p456 = por %p454, %p455
      %p457 = scmp.ne.s32.totalorder %s445, %s446
      %p458 = scmp.eq.s32.totalorder %s38, 4
      %p459 = por %p457, %p458
      %p461 = scmp.ne.s32.totalorder %s446, %s460
      %p462 = scmp.eq.s32.totalorder %s38, 0
      %p463 = por %p461, %p462
      %s465 = sadd.s32 %s464, 1
      %p468 = scmp.eq.s32.totalorder %s32, 4
      %p469 = scmp.ne.s32.totalorder %s464, %s466
      %p470 = scmp.eq.s32.totalorder %s32, 0
      %p471 = por %p469, %p470
      %p472 = scmp.ne.s32.totalorder %s464, %s466
      %p473 = scmp.eq.s32.totalorder %s37, 4
      %p474 = por %p472, %p473
      %p475 = scmp.ne.s32.totalorder %s466, %s467
      %p476 = scmp.eq.s32.totalorder %s37, 0
      %p477 = por %p475, %p476
      %p478 = scmp.ne.s32.totalorder %s466, %s467
      %p479 = scmp.eq.s32.totalorder %s38, 4
      %p480 = por %p478, %p479
      %p482 = scmp.ne.s32.totalorder %s467, %s481
      %p483 = scmp.eq.s32.totalorder %s38, 0
      %p484 = por %p482, %p483
      %s486 = sadd.s32 %s485, 1
      %p489 = scmp.eq.s32.totalorder %s32, 4
      %p490 = scmp.ne.s32.totalorder %s485, %s487
      %p491 = scmp.eq.s32.totalorder %s32, 0
      %p492 = por %p490, %p491
      %p493 = scmp.ne.s32.totalorder %s485, %s487
      %p494 = scmp.eq.s32.totalorder %s37, 4
      %p495 = por %p493, %p494
      %p496 = scmp.ne.s32.totalorder %s487, %s488
      %p497 = scmp.eq.s32.totalorder %s37, 0
      %p498 = por %p496, %p497
      %p499 = scmp.ne.s32.totalorder %s487, %s488
      %p500 = scmp.eq.s32.totalorder %s38, 4
      %p501 = por %p499, %p500
      %p503 = scmp.ne.s32.totalorder %s488, %s502
      %p504 = scmp.eq.s32.totalorder %s38, 0
      %p505 = por %p503, %p504
      %s507 = sadd.s32 %s506, 1
      %p510 = scmp.eq.s32.totalorder %s32, 4
      %p511 = scmp.ne.s32.totalorder %s506, %s508
      %p512 = scmp.eq.s32.totalorder %s32, 0
      %p513 = por %p511, %p512
      %p514 = scmp.ne.s32.totalorder %s506, %s508
      %p515 = scmp.eq.s32.totalorder %s37, 4
      %p516 = por %p514, %p515
      %p517 = scmp.ne.s32.totalorder %s508, %s509
      %p518 = scmp.eq.s32.totalorder %s37, 0
      %p519 = por %p517, %p518
      %p520 = scmp.ne.s32.totalorder %s508, %s509
      %p521 = scmp.eq.s32.totalorder %s38, 4
      %p522 = por %p520, %p521
      %p524 = scmp.ne.s32.totalorder %s509, %s523
      %p525 = scmp.eq.s32.totalorder %s38, 0
      %p526 = por %p524, %p525
      %s528 = sadd.s32 %s527, 1
      %p531 = scmp.eq.s32.totalorder %s32, 4
      %p532 = scmp.ne.s32.totalorder %s527, %s529
      %p533 = scmp.eq.s32.totalorder %s32, 0
      %p534 = por %p532, %p533
      %p535 = scmp.ne.s32.totalorder %s527, %s529
      %p536 = scmp.eq.s32.totalorder %s37, 4
      %p537 = por %p535, %p536
      %p538 = scmp.ne.s32.totalorder %s529, %s530
      %p539 = scmp.eq.s32.totalorder %s37, 0
      %p540 = por %p538, %p539
      %p541 = scmp.ne.s32.totalorder %s529, %s530
      %p542 = scmp.eq.s32.totalorder %s38, 4
      %p543 = por %p541, %p542
      %p545 = scmp.ne.s32.totalorder %s530, %s544
      %p546 = scmp.eq.s32.totalorder %s38, 0
      %p547 = por %p545, %p546
      %s548 = ssub.s32 %s32, %s39
      %p549 = scmp.eq.s32.totalorder %s548, 0
      %s551 = sadd.s32 %s550, 1
      %s552 = scalar_select %p549, %s550, %s551
      %p555 = pneg %p549
      %p556 = scmp.eq.s32.totalorder %s32, 4
      %p557 = por %p555, %p556
      %p558 = scmp.ne.s32.totalorder %s550, %s553
      %p559 = scmp.eq.s32.totalorder %s32, 0
      %p560 = por %p558, %p559
      %p561 = scmp.ne.s32.totalorder %s550, %s553
      %p562 = scmp.eq.s32.totalorder %s37, 4
      %p563 = por %p561, %p562
      %p564 = scmp.ne.s32.totalorder %s553, %s554
      %p565 = scmp.eq.s32.totalorder %s37, 0
      %p566 = por %p564, %p565
      %p567 = scmp.ne.s32.totalorder %s553, %s554
      %p568 = scmp.eq.s32.totalorder %s38, 4
      %p569 = por %p567, %p568
      %p571 = scmp.ne.s32.totalorder %s554, %s570
      %p572 = scmp.eq.s32.totalorder %s38, 0
      %p573 = por %p571, %p572
      %p574 = scmp.le.s32.totalorder 1, %s32
      %p575 = scmp.lt.s32.totalorder %s32, 6
      %p576 = pnand %p574, %p575
      %p577 = pneg %p576
      // Predicated region
      $region9: #{tpu_custom_call.1} parent=5 // pred_check
        _
      $region10: #{tpu_custom_call.1} parent=5 // pred_check_branch
        %579 = sbr.rel (%p576) target = $region12
      $region11: #{tpu_custom_call.1} parent=5 // pred_region
        %s580 = ssub.s32 %s32, 1
        // Predicated region
        $region13: #{tpu_custom_call.1} parent=11 // pred_check
          %p581 = pneg %p183
        $region14: #{tpu_custom_call.1} parent=11 // pred_check_branch
          %583 = sbr.rel (%p581) target = $region16
        $region15: #{tpu_custom_call.1} parent=11 // pred_region
          _
        $region16: #{tpu_custom_call.1} parent=11 // pred_fallthru
          _
        // Predicated region
        $region17: #{tpu_custom_call.1} parent=11 // pred_check
          %p584 = pneg %p204
        $region18: #{tpu_custom_call.1} parent=11 // pred_check_branch
          %586 = sbr.rel (%p584) target = $region20
        $region19: #{tpu_custom_call.1} parent=11 // pred_region
          _
        $region20: #{tpu_custom_call.1} parent=11 // pred_fallthru
          _
        // Predicated region
        $region21: #{tpu_custom_call.1} parent=11 // pred_check
          %p587 = pneg %p225
        $region22: #{tpu_custom_call.1} parent=11 // pred_check_branch
          %589 = sbr.rel (%p587) target = $region24
        $region23: #{tpu_custom_call.1} parent=11 // pred_region
          _
        $region24: #{tpu_custom_call.1} parent=11 // pred_fallthru
          _
        // Predicated region
        $region25: #{tpu_custom_call.1} parent=11 // pred_check
          %p590 = pneg %p246
        $region26: #{tpu_custom_call.1} parent=11 // pred_check_branch
          %592 = sbr.rel (%p590) target = $region28
        $region27: #{tpu_custom_call.1} parent=11 // pred_region
          _
        $region28: #{tpu_custom_call.1} parent=11 // pred_fallthru
          _
        // Predicated region
        $region29: #{tpu_custom_call.1} parent=11 // pred_check
          %p593 = pneg %p267
        $region30: #{tpu_custom_call.1} parent=11 // pred_check_branch
          %595 = sbr.rel (%p593) target = $region32
        $region31: #{tpu_custom_call.1} parent=11 // pred_region
          _
        $region32: #{tpu_custom_call.1} parent=11 // pred_fallthru
          _
        // Predicated region
        $region33: #{tpu_custom_call.1} parent=11 // pred_check
          %p596 = pneg %p288
        $region34: #{tpu_custom_call.1} parent=11 // pred_check_branch
          %598 = sbr.rel (%p596) target = $region36
        $region35: #{tpu_custom_call.1} parent=11 // pred_region
          _
        $region36: #{tpu_custom_call.1} parent=11 // pred_fallthru
          _
        // Predicated region
        $region37: #{tpu_custom_call.1} parent=11 // pred_check
          %p599 = pneg %p309
        $region38: #{tpu_custom_call.1} parent=11 // pred_check_branch
          %601 = sbr.rel (%p599) target = $region40
        $region39: #{tpu_custom_call.1} parent=11 // pred_region
          _
        $region40: #{tpu_custom_call.1} parent=11 // pred_fallthru
          _
        // Predicated region
        $region41: #{tpu_custom_call.1} parent=11 // pred_check
          %p602 = pneg %p330
        $region42: #{tpu_custom_call.1} parent=11 // pred_check_branch
          %604 = sbr.rel (%p602) target = $region44
        $region43: #{tpu_custom_call.1} parent=11 // pred_region
          _
        $region44: #{tpu_custom_call.1} parent=11 // pred_fallthru
          _
        // Predicated region
        $region45: #{tpu_custom_call.1} parent=11 // pred_check
          %p605 = pneg %p351
        $region46: #{tpu_custom_call.1} parent=11 // pred_check_branch
          %607 = sbr.rel (%p605) target = $region48
        $region47: #{tpu_custom_call.1} parent=11 // pred_region
          _
        $region48: #{tpu_custom_call.1} parent=11 // pred_fallthru
          _
        // Predicated region
        $region49: #{tpu_custom_call.1} parent=11 // pred_check
          %p608 = pneg %p372
        $region50: #{tpu_custom_call.1} parent=11 // pred_check_branch
          %610 = sbr.rel (%p608) target = $region52
        $region51: #{tpu_custom_call.1} parent=11 // pred_region
          _
        $region52: #{tpu_custom_call.1} parent=11 // pred_fallthru
          _
        // Predicated region
        $region53: #{tpu_custom_call.1} parent=11 // pred_check
          %p611 = pneg %p393
        $region54: #{tpu_custom_call.1} parent=11 // pred_check_branch
          %613 = sbr.rel (%p611) target = $region56
        $region55: #{tpu_custom_call.1} parent=11 // pred_region
          _
        $region56: #{tpu_custom_call.1} parent=11 // pred_fallthru
          _
        // Predicated region
        $region57: #{tpu_custom_call.1} parent=11 // pred_check
          %p614 = pneg %p414
        $region58: #{tpu_custom_call.1} parent=11 // pred_check_branch
          %616 = sbr.rel (%p614) target = $region60
        $region59: #{tpu_custom_call.1} parent=11 // pred_region
          _
        $region60: #{tpu_custom_call.1} parent=11 // pred_fallthru
          _
        // Predicated region
        $region61: #{tpu_custom_call.1} parent=11 // pred_check
          %p617 = pneg %p435
        $region62: #{tpu_custom_call.1} parent=11 // pred_check_branch
          %619 = sbr.rel (%p617) target = $region64
        $region63: #{tpu_custom_call.1} parent=11 // pred_region
          _
        $region64: #{tpu_custom_call.1} parent=11 // pred_fallthru
          _
        // Predicated region
        $region65: #{tpu_custom_call.1} parent=11 // pred_check
          %p620 = pneg %p456
        $region66: #{tpu_custom_call.1} parent=11 // pred_check_branch
          %622 = sbr.rel (%p620) target = $region68
        $region67: #{tpu_custom_call.1} parent=11 // pred_region
          _
        $region68: #{tpu_custom_call.1} parent=11 // pred_fallthru
          _
        // Predicated region
        $region69: #{tpu_custom_call.1} parent=11 // pred_check
          %p623 = pneg %p477
        $region70: #{tpu_custom_call.1} parent=11 // pred_check_branch
          %625 = sbr.rel (%p623) target = $region72
        $region71: #{tpu_custom_call.1} parent=11 // pred_region
          _
        $region72: #{tpu_custom_call.1} parent=11 // pred_fallthru
          _
        // Predicated region
        $region73: #{tpu_custom_call.1} parent=11 // pred_check
          %p626 = pneg %p498
        $region74: #{tpu_custom_call.1} parent=11 // pred_check_branch
          %628 = sbr.rel (%p626) target = $region76
        $region75: #{tpu_custom_call.1} parent=11 // pred_region
          _
        $region76: #{tpu_custom_call.1} parent=11 // pred_fallthru
          _
        // Predicated region
        $region77: #{tpu_custom_call.1} parent=11 // pred_check
          %p629 = pneg %p519
        $region78: #{tpu_custom_call.1} parent=11 // pred_check_branch
          %631 = sbr.rel (%p629) target = $region80
        $region79: #{tpu_custom_call.1} parent=11 // pred_region
          _
        $region80: #{tpu_custom_call.1} parent=11 // pred_fallthru
          _
        // Predicated region
        $region81: #{tpu_custom_call.1} parent=11 // pred_check
          %p632 = pneg %p540
        $region82: #{tpu_custom_call.1} parent=11 // pred_check_branch
          %634 = sbr.rel (%p632) target = $region84
        $region83: #{tpu_custom_call.1} parent=11 // pred_region
          _
        $region84: #{tpu_custom_call.1} parent=11 // pred_fallthru
          _
      $region12: #{tpu_custom_call.1} parent=5 // pred_fallthru
        _
      %p635 = scmp.lt.s32.totalorder %s32, 5
      // Predicated region
      $region85: #{tpu_custom_call.1} parent=5 // pred_check
        %p636 = pneg %p635
      $region86: #{tpu_custom_call.1} parent=5 // pred_check_branch
        %638 = sbr.rel (%p636) target = $region88
      $region87: #{tpu_custom_call.1} parent=5 // pred_region
        // Predicated region
        $region89: #{tpu_custom_call.1} parent=87 // pred_check
          %p639 = pneg %p52
        $region90: #{tpu_custom_call.1} parent=87 // pred_check_branch
          %641 = sbr.rel (%p639) target = $region92
        $region91: #{tpu_custom_call.1} parent=87 // pred_region
          %p642 = scmp.lt.s32.totalorder %s32, 4
          %s643 = scalar_select %p642, %s32, 4
          %s644 = smul.addr %s643, 4
          %s645 = scalar_lea.vmem %s0, %s644
        $region92: #{tpu_custom_call.1} parent=87 // pred_fallthru
          _
        // Predicated region
        $region93: #{tpu_custom_call.1} parent=87 // pred_check
          %p646 = pneg %p78
        $region94: #{tpu_custom_call.1} parent=87 // pred_check_branch
          %648 = sbr.rel (%p646) target = $region96
        $region95: #{tpu_custom_call.1} parent=87 // pred_region
          %p649 = scmp.lt.s32.totalorder %s32, 4
          %s650 = scalar_select %p649, %s32, 4
          %s651 = smul.addr %s650, 4
          %s652 = scalar_lea.vmem %s1, %s651
        $region96: #{tpu_custom_call.1} parent=87 // pred_fallthru
          _
        // Predicated region
        $region97: #{tpu_custom_call.1} parent=87 // pred_check
          %p653 = pneg %p104
        $region98: #{tpu_custom_call.1} parent=87 // pred_check_branch
          %655 = sbr.rel (%p653) target = $region100
        $region99: #{tpu_custom_call.1} parent=87 // pred_region
          %p656 = scmp.lt.s32.totalorder %s32, 4
          %s657 = scalar_select %p656, %s32, 4
          %s658 = smul.addr %s657, 4
          %s659 = scalar_lea.vmem %s2, %s658
        $region100: #{tpu_custom_call.1} parent=87 // pred_fallthru
          _
        // Predicated region
        $region101: #{tpu_custom_call.1} parent=87 // pred_check
          %p660 = pneg %p130
        $region102: #{tpu_custom_call.1} parent=87 // pred_check_branch
          %662 = sbr.rel (%p660) target = $region104
        $region103: #{tpu_custom_call.1} parent=87 // pred_region
          %p663 = scmp.lt.s32.totalorder %s32, 4
          %s664 = scalar_select %p663, %s32, 4
          %s665 = scalar_lea.vmem %s3, %s664
        $region104: #{tpu_custom_call.1} parent=87 // pred_fallthru
          _
        // Predicated region
        $region105: #{tpu_custom_call.1} parent=87 // pred_check
          %p666 = pneg %p156
        $region106: #{tpu_custom_call.1} parent=87 // pred_check_branch
          %668 = sbr.rel (%p666) target = $region108
        $region107: #{tpu_custom_call.1} parent=87 // pred_region
          %p669 = scmp.lt.s32.totalorder %s32, 4
          %s670 = scalar_select %p669, %s32, 4
          %s671 = scalar_lea.vmem %s4, %s670
        $region108: #{tpu_custom_call.1} parent=87 // pred_fallthru
          _
      $region88: #{tpu_custom_call.1} parent=5 // pred_fallthru
        _
      %p672 = scmp.le.s32.totalorder 1, %s32
      %p673 = scmp.lt.s32.totalorder %s32, 6
      %p674 = pnand %p672, %p673
      %p675 = pneg %p674
      // Predicated region
      $region109: #{tpu_custom_call.1} parent=5 // pred_check
        _
      $region110: #{tpu_custom_call.1} parent=5 // pred_check_branch
        %677 = sbr.rel (%p674) target = $region112
      $region111: #{tpu_custom_call.1} parent=5 // pred_region
        %s678 = ssub.s32 %s32, 1
        %p679 = scmp.lt.s32.totalorder %s37, 4
        %s680 = scalar_select %p679, %s37, 4
        %s681 = smul.addr %s680, 4
        %s682 = scalar_lea.vmem %s0, %s681
        %p683 = pneg %p58
        %p684 = pneg %p55
        %p685 = scmp.lt.s32.totalorder %s37, 4
        %s686 = scalar_select %p685, %s37, 4
        %s687 = smul.addr %s686, 4
        %s688 = scalar_lea.vmem %s1, %s687
        %p689 = pneg %p84
        %p690 = pneg %p81
        %p691 = scmp.lt.s32.totalorder %s37, 4
        %s692 = scalar_select %p691, %s37, 4
        %s693 = smul.addr %s692, 4
        %s694 = scalar_lea.vmem %s2, %s693
        %p695 = pneg %p110
        %p696 = pneg %p107
        %p697 = scmp.lt.s32.totalorder %s37, 4
        %s698 = scalar_select %p697, %s37, 4
        %s699 = scalar_lea.vmem %s3, %s698
        %p700 = pneg %p136
        %p701 = pneg %p133
        %p702 = scmp.lt.s32.totalorder %s37, 4
        %s703 = scalar_select %p702, %s37, 4
        %s704 = scalar_lea.vmem %s4, %s703
        %p705 = pneg %p162
        %p706 = pneg %p159
        %p707 = pneg %p183
        %p708 = pneg %p180
        %p709 = pneg %p204
        %p710 = pneg %p201
        %p711 = pneg %p225
        %p712 = pneg %p222
        %p713 = pneg %p246
        %p714 = pneg %p243
        %p715 = pneg %p267
        %p716 = pneg %p264
        %p717 = pneg %p288
        %p718 = pneg %p285
        %p719 = pneg %p309
        %p720 = pneg %p306
        %p721 = pneg %p330
        %p722 = pneg %p327
        %p723 = pneg %p351
        %p724 = pneg %p348
        %p725 = pneg %p372
        %p726 = pneg %p369
        %p727 = pneg %p393
        %p728 = pneg %p390
        %p729 = pneg %p414
        %p730 = pneg %p411
        %p731 = pneg %p435
        %p732 = pneg %p432
        %p733 = pneg %p456
        %p734 = pneg %p453
        %p735 = pneg %p477
        %p736 = pneg %p474
        %p737 = pneg %p498
        %p738 = pneg %p495
        %p739 = pneg %p519
        %p740 = pneg %p516
        %p741 = pneg %p540
        %p742 = pneg %p537
        %p743 = pneg %p566
        %p744 = pneg %p563
        %s745 = sand.u32 %s553, 1
        %s746 = scalar_lea.sflag [#allocation4], %s745
        %s747 = sand.u32 %s553, 1
        %s748 = smul.addr %s747, 4
        %s749 = scalar_lea.vmem [#allocation3], %s748
        %p750 = scmp.lt.s32.totalorder %s37, 4
        %s751 = scalar_select %p750, %s37, 4
        %s752 = smul.addr %s751, 4
        %s753 = scalar_lea.vmem %s0, %s752
        %p754 = scmp.lt.s32.totalorder %s37, 4
        %s755 = scalar_select %p754, %s37, 4
        %s756 = smul.addr %s755, 4
        %s757 = scalar_lea.vmem %s1, %s756
        %p758 = scmp.lt.s32.totalorder %s37, 4
        %s759 = scalar_select %p758, %s37, 4
        %s760 = smul.addr %s759, 4
        %s761 = scalar_lea.vmem %s2, %s760
        %p762 = scmp.lt.s32.totalorder %s37, 4
        %s763 = scalar_select %p762, %s37, 4
        %s764 = scalar_lea.vmem %s3, %s763
        %p765 = scmp.lt.s32.totalorder %s37, 4
        %s766 = scalar_select %p765, %s37, 4
        %s767 = scalar_lea.vmem %s4, %s766
        %p768 = scmp.eq.s32.totalorder %s37, 0
        // Predicated region
        $region113: #{tpu_custom_call.1} parent=111 // pred_check
          %p769 = pneg %p768
        $region114: #{tpu_custom_call.1} parent=111 // pred_check_branch
          %771 = sbr.rel (%p769) target = $region116
        $region115: #{tpu_custom_call.1} parent=111 // pred_region
          %v772 = vld [vmem:[%s6] sm:$0xf]
          %vm773 = vcmask 125952
          %774 = vst.msk [vmem:[#allocation2] sm:$0xf] %vm773, %v772
        $region116: #{tpu_custom_call.1} parent=111 // pred_fallthru
          _
        %v775 = vld [vmem:[%s7] sm:$0xff]
        %v776 = vld [vmem:[%s8] sm:$0xff]
        %v777 = vld [vmem:[%s9] sm:$0xf]
        %v778 = vld [vmem:[%s753] sm:$0xf]
        %v779 = vld [vmem:[%s10] sm:$0xff]
        %vm780 = vcmask 64512
        %v782 = vsel %vm780, %v778, 0
        %784 = vmatpush.msra.mxu0 0.0
        %785 = vmatpush.msra.mxu0 0.0
        %786 = vmatpush.msra.mxu0 0.0
        %787 = vmatpush.msra.mxu0 0.0
        %788 = vmatpush.msra.mxu0 0.0
        %789 = vmatpush.msra.mxu0 0.0
        %790 = vmatpush.msra.mxu0 0.0
        %791 = vmatpush.msra.mxu0 0.0
        %792 = vmatpush.msra.mxu0 0.0
        %793 = vmatpush.msra.mxu0 0.0
        %794 = vmatpush.msra.mxu0 0.0
        %795 = vmatpush.msra.mxu0 0.0
        %796 = vmatpush.msra.mxu0 0.0
        %797 = vmatpush.msra.mxu0 0.0
        %798 = vmatpush.msra.mxu0 0.0
        %799 = vmatpush.msra.mxu0 %v779
        %800 = vmatmul.f32.gmra.mxu0 %v782
        %v801 = vpop.f32.mrf.mxu0
        %v802 = vadd.f32 0.0, %v801
        %803 = vdwg.mxu0
        %v804 = vld [vmem:[%s11] sm:$0xff]
        %805 = vmatpush.msra.mxu0 0.0
        %806 = vmatpush.msra.mxu0 0.0
        %807 = vmatpush.msra.mxu0 0.0
        %808 = vmatpush.msra.mxu0 0.0
        %809 = vmatpush.msra.mxu0 0.0
        %810 = vmatpush.msra.mxu0 0.0
        %811 = vmatpush.msra.mxu0 0.0
        %812 = vmatpush.msra.mxu0 0.0
        %813 = vmatpush.msra.mxu0 0.0
        %814 = vmatpush.msra.mxu0 0.0
        %815 = vmatpush.msra.mxu0 0.0
        %816 = vmatpush.msra.mxu0 0.0
        %817 = vmatpush.msra.mxu0 0.0
        %818 = vmatpush.msra.mxu0 0.0
        %819 = vmatpush.msra.mxu0 0.0
        %820 = vmatpush.msra.mxu0 %v804
        %821 = vmatmul.f32.gmra.mxu0 %v782
        %v822 = vpop.f32.mrf.mxu0
        %v823 = vadd.f32 0.0, %v822
        %824 = vdwg.mxu0
        %v825 = vld [vmem:[%s12] sm:$0xff]
        %826 = vmatpush.msra.mxu0 0.0
        %827 = vmatpush.msra.mxu0 0.0
        %828 = vmatpush.msra.mxu0 0.0
        %829 = vmatpush.msra.mxu0 0.0
        %830 = vmatpush.msra.mxu0 0.0
        %831 = vmatpush.msra.mxu0 0.0
        %832 = vmatpush.msra.mxu0 0.0
        %833 = vmatpush.msra.mxu0 0.0
        %834 = vmatpush.msra.mxu0 0.0
        %835 = vmatpush.msra.mxu0 0.0
        %836 = vmatpush.msra.mxu0 0.0
        %837 = vmatpush.msra.mxu0 0.0
        %838 = vmatpush.msra.mxu0 0.0
        %839 = vmatpush.msra.mxu0 0.0
        %840 = vmatpush.msra.mxu0 0.0
        %841 = vmatpush.msra.mxu0 %v825
        %842 = vmatmul.f32.gmra.mxu0 %v782
        %v843 = vpop.f32.mrf.mxu0
        %v844 = vadd.f32 0.0, %v843
        %845 = vdwg.mxu0
        %vm846 = vcmask 31744
        %v848 = vsel %vm846, %v776, 0
        %vm850 = vcmask 1043456
        %v852 = vsel %vm850, %v844, 0
        %854 = vmatpush.msra.mxu0 0.0
        %855 = vmatpush.msra.mxu0 0.0
        %856 = vmatpush.msra.mxu0 0.0
        %857 = vmatpush.msra.mxu0 0.0
        %858 = vmatpush.msra.mxu0 0.0
        %859 = vmatpush.msra.mxu0 0.0
        %860 = vmatpush.msra.mxu0 0.0
        %861 = vmatpush.msra.mxu0 0.0
        %862 = vmatpush.msra.mxu0 0.0
        %863 = vmatpush.msra.mxu0 0.0
        %864 = vmatpush.msra.mxu0 0.0
        %865 = vmatpush.msra.mxu0 0.0
        %866 = vmatpush.msra.mxu0 0.0
        %867 = vmatpush.msra.mxu0 0.0
        %868 = vmatpush.msra.mxu0 0.0
        %869 = vmatpush.msra.mxu0 %v852
        %870 = vmatmul.f32.gmra.mxu0 %v848
        %v871 = vpop.f32.mrf.mxu0
        %v872 = vadd.f32 0.0, %v871
        %873 = vdwg.mxu0
        %v875 = vsel %vm846, %v775, 0
        %v878 = vsel %vm850, %v823, 0
        %880 = vmatpush.msra.mxu0 0.0
        %881 = vmatpush.msra.mxu0 0.0
        %882 = vmatpush.msra.mxu0 0.0
        %883 = vmatpush.msra.mxu0 0.0
        %884 = vmatpush.msra.mxu0 0.0
        %885 = vmatpush.msra.mxu0 0.0
        %886 = vmatpush.msra.mxu0 0.0
        %887 = vmatpush.msra.mxu0 0.0
        %888 = vmatpush.msra.mxu0 0.0
        %889 = vmatpush.msra.mxu0 0.0
        %890 = vmatpush.msra.mxu0 0.0
        %891 = vmatpush.msra.mxu0 0.0
        %892 = vmatpush.msra.mxu0 0.0
        %893 = vmatpush.msra.mxu0 0.0
        %894 = vmatpush.msra.mxu0 0.0
        %895 = vmatpush.msra.mxu0 %v878
        %896 = vmatmul.f32.gmra.mxu0 %v875
        %v897 = vpop.f32.mrf.mxu0
        %v898 = vadd.f32 %v872, %v897
        %899 = vdwg.mxu0
        %vm900 = vcmp.gt.f32.partialorder %v898, 0.0
        %v901 = vmul.f32 %v898, 0.01
        %v902 = vsel %vm900, %v898, %v901
        %vm903 = vcmask 15360
        %v904 = vsel %vm903, %v902, -inf
        %v905 = vrot.slane %v904, 4
        %v906 = vmax.f32 %v904, %v905
        %v907 = vrot.slane %v906, 2
        %v908 = vmax.f32 %v906, %v907
        %v909 = vrot.slane %v908, 1
        %v910 = vmax.f32 %v908, %v909
        %v911 = vsub.f32 %v902, %v910
        %v912 = vmul.f32 %v911, 1.442695
        %v913 = vpow.pop %v912
        %v914 = vsel %vm903, %v913, 0.0
        %v915 = vrot.slane %v914, 4
        %v916 = vadd.f32 %v914, %v915
        %v917 = vrot.slane %v916, 2
        %v918 = vadd.f32 %v916, %v917
        %v919 = vrot.slane %v918, 1
        %v920 = vadd.f32 %v918, %v919
        %v921 = vrcp.pop %v920
        %v922 = vmul.f32 %v913, %v921
        %v924 = vsel %vm850, %v802, 0
        %926 = vmatpush.msra.mxu0 0.0
        %927 = vmatpush.msra.mxu0 0.0
        %928 = vmatpush.msra.mxu0 0.0
        %929 = vmatpush.msra.mxu0 0.0
        %930 = vmatpush.msra.mxu0 0.0
        %931 = vmatpush.msra.mxu0 0.0
        %932 = vmatpush.msra.mxu0 0.0
        %933 = vmatpush.msra.mxu0 0.0
        %934 = vmatpush.msra.mxu0 0.0
        %935 = vmatpush.msra.mxu0 0.0
        %936 = vmatpush.msra.mxu0 0.0
        %937 = vmatpush.msra.mxu0 0.0
        %938 = vmatpush.msra.mxu0 0.0
        %939 = vmatpush.msra.mxu0 0.0
        %940 = vmatpush.msra.mxu0 0.0
        %941 = vmatpush.msra.mxu0 %v924
        %942 = vmatmul.f32.gmra.mxu0 %v875
        %v943 = vpop.f32.mrf.mxu0
        %v944 = vadd.f32 0.0, %v943
        %945 = vdwg.mxu0
        %v946 = vld [vmem:[%s13] sm:$0x3]
        %v948 = vsel %vm903, %v922, 0
        %vm950 = vcmask 1041408
        %v952 = vsel %vm950, %v946, 0
        %954 = vmatpush.msra.mxu0 0.0
        %955 = vmatpush.msra.mxu0 0.0
        %956 = vmatpush.msra.mxu0 0.0
        %957 = vmatpush.msra.mxu0 0.0
        %958 = vmatpush.msra.mxu0 0.0
        %959 = vmatpush.msra.mxu0 0.0
        %960 = vmatpush.msra.mxu0 0.0
        %961 = vmatpush.msra.mxu0 0.0
        %962 = vmatpush.msra.mxu0 0.0
        %963 = vmatpush.msra.mxu0 0.0
        %964 = vmatpush.msra.mxu0 0.0
        %965 = vmatpush.msra.mxu0 0.0
        %966 = vmatpush.msra.mxu0 0.0
        %967 = vmatpush.msra.mxu0 0.0
        %968 = vmatpush.msra.mxu0 0.0
        %969 = vmatpush.msra.mxu0 %v952
        %970 = vmatmul.f32.gmra.mxu0 %v948
        %v971 = vpop.f32.mrf.mxu0
        %v972 = vadd.f32 0.0, %v971
        %973 = vdwg.mxu0
        %v974 = vmul.f32 %v944, %v972
        %v976 = vsel %vm780, %v777, 0
        %978 = vmatpush.msra.mxu0 0.0
        %979 = vmatpush.msra.mxu0 0.0
        %980 = vmatpush.msra.mxu0 0.0
        %981 = vmatpush.msra.mxu0 0.0
        %982 = vmatpush.msra.mxu0 0.0
        %983 = vmatpush.msra.mxu0 0.0
        %984 = vmatpush.msra.mxu0 0.0
        %985 = vmatpush.msra.mxu0 0.0
        %986 = vmatpush.msra.mxu0 0.0
        %987 = vmatpush.msra.mxu0 0.0
        %988 = vmatpush.msra.mxu0 0.0
        %989 = vmatpush.msra.mxu0 0.0
        %990 = vmatpush.msra.mxu0 0.0
        %991 = vmatpush.msra.mxu0 0.0
        %992 = vmatpush.msra.mxu0 0.0
        %993 = vmatpush.msra.mxu0 %v974
        %994 = vmatmul.f32.gmra.mxu0 %v976
        %v995 = vpop.f32.mrf.mxu0
        %v996 = vadd.f32 0.0, %v995
        %997 = vdwg.mxu0
        %vm998 = vcmp.gt.f32.partialorder %v996, 0.0
        %v999 = vmul.f32 %v996, 1.442695
        %v1000 = vpow.pop %v999
        %v1001 = vsub.f32 %v1000, 1.0
        %v1002 = vsel %vm998, %v996, %v1001
        %v1003 = vld [vmem:[%s14] sm:$0xff]
        %v1004 = vld [vmem:[%s14 + $0x8] sm:$0xff]
        %vm1005 = vcmask 130048
        %v1007 = vsel %vm1005, %v1002, 0
        %1009 = vmatpush.msra.mxu0 0.0
        %1010 = vmatpush.msra.mxu0 0.0
        %1011 = vmatpush.msra.mxu0 0.0
        %1012 = vmatpush.msra.mxu0 0.0
        %1013 = vmatpush.msra.mxu0 0.0
        %1014 = vmatpush.msra.mxu0 0.0
        %1015 = vmatpush.msra.mxu0 0.0
        %1016 = vmatpush.msra.mxu0 0.0
        %1017 = vmatpush.msra.mxu0 0.0
        %1018 = vmatpush.msra.mxu0 0.0
        %1019 = vmatpush.msra.mxu0 0.0
        %1020 = vmatpush.msra.mxu0 0.0
        %1021 = vmatpush.msra.mxu0 0.0
        %1022 = vmatpush.msra.mxu0 0.0
        %1023 = vmatpush.msra.mxu0 %v1004
        %1024 = vmatpush.msra.mxu0 %v1003
        %1025 = vmatmul.f32.gmra.mxu0 %v1007
        %v1026 = vpop.f32.mrf.mxu0
        %v1027 = vadd.f32 0.0, %v1026
        %1028 = vdwg.mxu0
        %v1029 = vld [vmem:[%s15] sm:$0xff]
        %v1030 = vld [vmem:[%s15 + $0x8] sm:$0xff]
        %1031 = vmatpush.msra.mxu0 0.0
        %1032 = vmatpush.msra.mxu0 0.0
        %1033 = vmatpush.msra.mxu0 0.0
        %1034 = vmatpush.msra.mxu0 0.0
        %1035 = vmatpush.msra.mxu0 0.0
        %1036 = vmatpush.msra.mxu0 0.0
        %1037 = vmatpush.msra.mxu0 0.0
        %1038 = vmatpush.msra.mxu0 0.0
        %1039 = vmatpush.msra.mxu0 0.0
        %1040 = vmatpush.msra.mxu0 0.0
        %1041 = vmatpush.msra.mxu0 0.0
        %1042 = vmatpush.msra.mxu0 0.0
        %1043 = vmatpush.msra.mxu0 0.0
        %1044 = vmatpush.msra.mxu0 0.0
        %1045 = vmatpush.msra.mxu0 %v1030
        %1046 = vmatpush.msra.mxu0 %v1029
        %1047 = vmatmul.f32.gmra.mxu0 %v1007
        %v1048 = vpop.f32.mrf.mxu0
        %v1049 = vadd.f32 0.0, %v1048
        %1050 = vdwg.mxu0
        %v1051 = vld [vmem:[%s16] sm:$0xff]
        %v1052 = vld [vmem:[%s16 + $0x8] sm:$0xff]
        %1053 = vmatpush.msra.mxu0 0.0
        %1054 = vmatpush.msra.mxu0 0.0
        %1055 = vmatpush.msra.mxu0 0.0
        %1056 = vmatpush.msra.mxu0 0.0
        %1057 = vmatpush.msra.mxu0 0.0
        %1058 = vmatpush.msra.mxu0 0.0
        %1059 = vmatpush.msra.mxu0 0.0
        %1060 = vmatpush.msra.mxu0 0.0
        %1061 = vmatpush.msra.mxu0 0.0
        %1062 = vmatpush.msra.mxu0 0.0
        %1063 = vmatpush.msra.mxu0 0.0
        %1064 = vmatpush.msra.mxu0 0.0
        %1065 = vmatpush.msra.mxu0 0.0
        %1066 = vmatpush.msra.mxu0 0.0
        %1067 = vmatpush.msra.mxu0 %v1052
        %1068 = vmatpush.msra.mxu0 %v1051
        %1069 = vmatmul.f32.gmra.mxu0 %v1007
        %v1070 = vpop.f32.mrf.mxu0
        %v1071 = vadd.f32 0.0, %v1070
        %1072 = vdwg.mxu0
        %v1074 = vsel %vm850, %v1071, 0
        %1076 = vmatpush.msra.mxu0 0.0
        %1077 = vmatpush.msra.mxu0 0.0
        %1078 = vmatpush.msra.mxu0 0.0
        %1079 = vmatpush.msra.mxu0 0.0
        %1080 = vmatpush.msra.mxu0 0.0
        %1081 = vmatpush.msra.mxu0 0.0
        %1082 = vmatpush.msra.mxu0 0.0
        %1083 = vmatpush.msra.mxu0 0.0
        %1084 = vmatpush.msra.mxu0 0.0
        %1085 = vmatpush.msra.mxu0 0.0
        %1086 = vmatpush.msra.mxu0 0.0
        %1087 = vmatpush.msra.mxu0 0.0
        %1088 = vmatpush.msra.mxu0 0.0
        %1089 = vmatpush.msra.mxu0 0.0
        %1090 = vmatpush.msra.mxu0 0.0
        %1091 = vmatpush.msra.mxu0 %v1074
        %1092 = vmatmul.f32.gmra.mxu0 %v848
        %v1093 = vpop.f32.mrf.mxu0
        %v1094 = vadd.f32 0.0, %v1093
        %1095 = vdwg.mxu0
        %v1097 = vsel %vm850, %v1049, 0
        %1099 = vmatpush.msra.mxu0 0.0
        %1100 = vmatpush.msra.mxu0 0.0
        %1101 = vmatpush.msra.mxu0 0.0
        %1102 = vmatpush.msra.mxu0 0.0
        %1103 = vmatpush.msra.mxu0 0.0
        %1104 = vmatpush.msra.mxu0 0.0
        %1105 = vmatpush.msra.mxu0 0.0
        %1106 = vmatpush.msra.mxu0 0.0
        %1107 = vmatpush.msra.mxu0 0.0
        %1108 = vmatpush.msra.mxu0 0.0
        %1109 = vmatpush.msra.mxu0 0.0
        %1110 = vmatpush.msra.mxu0 0.0
        %1111 = vmatpush.msra.mxu0 0.0
        %1112 = vmatpush.msra.mxu0 0.0
        %1113 = vmatpush.msra.mxu0 0.0
        %1114 = vmatpush.msra.mxu0 %v1097
        %1115 = vmatmul.f32.gmra.mxu0 %v875
        %v1116 = vpop.f32.mrf.mxu0
        %v1117 = vadd.f32 %v1094, %v1116
        %1118 = vdwg.mxu0
        %vm1119 = vcmp.gt.f32.partialorder %v1117, 0.0
        %v1120 = vmul.f32 %v1117, 0.01
        %v1121 = vsel %vm1119, %v1117, %v1120
        %v1122 = vsel %vm903, %v1121, -inf
        %v1123 = vrot.slane %v1122, 4
        %v1124 = vmax.f32 %v1122, %v1123
        %v1125 = vrot.slane %v1124, 2
        %v1126 = vmax.f32 %v1124, %v1125
        %v1127 = vrot.slane %v1126, 1
        %v1128 = vmax.f32 %v1126, %v1127
        %v1129 = vsub.f32 %v1121, %v1128
        %v1130 = vmul.f32 %v1129, 1.442695
        %v1131 = vpow.pop %v1130
        %v1132 = vsel %vm903, %v1131, 0.0
        %v1133 = vrot.slane %v1132, 4
        %v1134 = vadd.f32 %v1132, %v1133
        %v1135 = vrot.slane %v1134, 2
        %v1136 = vadd.f32 %v1134, %v1135
        %v1137 = vrot.slane %v1136, 1
        %v1138 = vadd.f32 %v1136, %v1137
        %v1139 = vrcp.pop %v1138
        %v1140 = vmul.f32 %v1131, %v1139
        %v1142 = vsel %vm850, %v1027, 0
        %1144 = vmatpush.msra.mxu0 0.0
        %1145 = vmatpush.msra.mxu0 0.0
        %1146 = vmatpush.msra.mxu0 0.0
        %1147 = vmatpush.msra.mxu0 0.0
        %1148 = vmatpush.msra.mxu0 0.0
        %1149 = vmatpush.msra.mxu0 0.0
        %1150 = vmatpush.msra.mxu0 0.0
        %1151 = vmatpush.msra.mxu0 0.0
        %1152 = vmatpush.msra.mxu0 0.0
        %1153 = vmatpush.msra.mxu0 0.0
        %1154 = vmatpush.msra.mxu0 0.0
        %1155 = vmatpush.msra.mxu0 0.0
        %1156 = vmatpush.msra.mxu0 0.0
        %1157 = vmatpush.msra.mxu0 0.0
        %1158 = vmatpush.msra.mxu0 0.0
        %1159 = vmatpush.msra.mxu0 %v1142
        %1160 = vmatmul.f32.gmra.mxu0 %v875
        %v1161 = vpop.f32.mrf.mxu0
        %v1162 = vadd.f32 0.0, %v1161
        %1163 = vdwg.mxu0
        %v1164 = vld [vmem:[%s17] sm:$0x3]
        %v1166 = vsel %vm903, %v1140, 0
        %v1169 = vsel %vm950, %v1164, 0
        %1171 = vmatpush.msra.mxu0 0.0
        %1172 = vmatpush.msra.mxu0 0.0
        %1173 = vmatpush.msra.mxu0 0.0
        %1174 = vmatpush.msra.mxu0 0.0
        %1175 = vmatpush.msra.mxu0 0.0
        %1176 = vmatpush.msra.mxu0 0.0
        %1177 = vmatpush.msra.mxu0 0.0
        %1178 = vmatpush.msra.mxu0 0.0
        %1179 = vmatpush.msra.mxu0 0.0
        %1180 = vmatpush.msra.mxu0 0.0
        %1181 = vmatpush.msra.mxu0 0.0
        %1182 = vmatpush.msra.mxu0 0.0
        %1183 = vmatpush.msra.mxu0 0.0
        %1184 = vmatpush.msra.mxu0 0.0
        %1185 = vmatpush.msra.mxu0 0.0
        %1186 = vmatpush.msra.mxu0 %v1169
        %1187 = vmatmul.f32.gmra.mxu0 %v1166
        %v1188 = vpop.f32.mrf.mxu0
        %v1189 = vadd.f32 0.0, %v1188
        %1190 = vdwg.mxu0
        %v1191 = vmul.f32 %v1162, %v1189
        %1192 = vmatpush.msra.mxu0 0.0
        %1193 = vmatpush.msra.mxu0 0.0
        %1194 = vmatpush.msra.mxu0 0.0
        %1195 = vmatpush.msra.mxu0 0.0
        %1196 = vmatpush.msra.mxu0 0.0
        %1197 = vmatpush.msra.mxu0 0.0
        %1198 = vmatpush.msra.mxu0 0.0
        %1199 = vmatpush.msra.mxu0 0.0
        %1200 = vmatpush.msra.mxu0 0.0
        %1201 = vmatpush.msra.mxu0 0.0
        %1202 = vmatpush.msra.mxu0 0.0
        %1203 = vmatpush.msra.mxu0 0.0
        %1204 = vmatpush.msra.mxu0 0.0
        %1205 = vmatpush.msra.mxu0 0.0
        %1206 = vmatpush.msra.mxu0 0.0
        %1207 = vmatpush.msra.mxu0 %v1191
        %1208 = vmatmul.f32.gmra.mxu0 %v976
        %v1209 = vpop.f32.mrf.mxu0
        %v1210 = vadd.f32 0.0, %v1209
        %1211 = vdwg.mxu0
        %vm1212 = vcmp.gt.f32.partialorder %v1210, 0.0
        %v1213 = vmul.f32 %v1210, 1.442695
        %v1214 = vpow.pop %v1213
        %v1215 = vsub.f32 %v1214, 1.0
        %v1216 = vsel %vm1212, %v1210, %v1215
        %v1217 = vld [vmem:[#allocation2] sm:$0xf]
        %1219 = vrot.lane.b32.xlu0 %v1217, 16
        %v1220 = vpop.permute.xlu0 %1219
        %v1222 = vsel %vm1005, %v1216, %v1220
        %v1223 = vld [vmem:[%s18] sm:$0xff]
        %v1224 = vld [vmem:[%s18 + $0x8] sm:$0xff]
        %v1225 = vld [vmem:[%s18 + $0x10] sm:$0xff]
        %v1226 = vld [vmem:[%s18 + $0x18] sm:$0xff]
        %v1227 = vld [vmem:[%s19] sm:$0x1]
        %v1229 = vperm.slane %v1227, 0
        %vm1231 = vcmask 261120
        %v1233 = vsel %vm1231, %v1222, 0
        %1235 = vmatpush.msra.mxu0 0.0
        %1236 = vmatpush.msra.mxu0 0.0
        %1237 = vmatpush.msra.mxu0 0.0
        %1238 = vmatpush.msra.mxu0 0.0
        %1239 = vmatpush.msra.mxu0 0.0
        %1240 = vmatpush.msra.mxu0 0.0
        %1241 = vmatpush.msra.mxu0 0.0
        %1242 = vmatpush.msra.mxu0 0.0
        %1243 = vmatpush.msra.mxu0 0.0
        %1244 = vmatpush.msra.mxu0 0.0
        %1245 = vmatpush.msra.mxu0 0.0
        %1246 = vmatpush.msra.mxu0 0.0
        %1247 = vmatpush.msra.mxu0 %v1226
        %1248 = vmatpush.msra.mxu0 %v1225
        %1249 = vmatpush.msra.mxu0 %v1224
        %1250 = vmatpush.msra.mxu0 %v1223
        %1251 = vmatmul.f32.gmra.mxu0 %v1233
        %v1252 = vpop.f32.mrf.mxu0
        %v1253 = vadd.f32 %v1229, %v1252
        %1254 = vdwg.mxu0
        %v1255 = vxor.u32 %v1253, 2147483648
        %v1256 = vmul.f32 %v1255, 1.442695
        %v1257 = vpow.pop %v1256
        %v1258 = vadd.f32 %v1257, 1.0
        %v1259 = vrcp.pop %v1258
        %v1260 = vmul.f32 %v1258, %v1259
        %v1261 = vsub.f32 1.0, %v1260
        %v1262 = vmul.f32 %v1259, %v1261
        %v1263 = vadd.f32 %v1259, %v1262
        %vm1264 = vweird.f32 %v1258
        %vm1265 = vweird.f32 %v1259
        %vm1266 = vmor %vm1264, %vm1265
        %v1267 = vsel %vm1266, %v1259, %v1263
        %v1268 = vand.u32 2147483647, %v1258
        %vm1269 = vcmp.eq.f32.partialorder %v1268, 8.507059e+37
        %v1270 = vand.u32 %v1258, 2147483648
        %v1271 = vor.u32 1.1754944e-38, %v1270
        %v1272 = vsel %vm1269, %v1271, %v1267
        %v1273 = vmul.f32 1.0, %v1272
        %1275 = vrot.lane.b32.xlu0 %v1253, 80
        %v1276 = vpop.permute.xlu0 %1275
        %v1278 = vmul.f32 %v1273, %v1276
        %1280 = vrot.lane.b32.xlu0 %v1278, 32
        %v1281 = vpop.permute.xlu0 %1280
        %v1283 = vadd.f32 %v1253, %v1281
        %v1284 = vtanh.pop %v1283
        %v1285 = vsub.f32 1.0, %v1273
        %1287 = vrot.lane.b32.xlu0 %v1284, 112
        %v1288 = vpop.permute.xlu0 %1287
        %v1290 = vmul.f32 %v1285, %v1288
        %v1291 = vmul.f32 %v1273, %v1220
        %v1292 = vadd.f32 %v1290, %v1291
        %1294 = vrot.lane.b32.xlu0 %v1292, 112
        %v1295 = vpop.permute.xlu0 %1294
        %vm1297 = vcmask 125952
        %1298 = vst.msk [vmem:[#allocation2] sm:$0xf] %vm1297, %v1295
        %v1299 = vld [vmem:[%s757] sm:$0xf]
        %v1300 = vld [vmem:[%s761] sm:$0xf]
        %v1301 = vld [vmem:[%s20] sm:$0xff]
        %v1302 = vld [vmem:[%s20 + $0x8] sm:$0xff]
        %v1303 = vld [vmem:[%s21] sm:$0x1]
        %1305 = vset.pattern.permute.xlu0 0
        %1306 = vperm.xlu0 %1305, %v1299
        %v1307 = vpop.permute.xlu0 %1306
        %v1309 = vperm.slane %v1303, 0
        %v1310 = vmul.f32 %v1307, %v1309
        %v1311 = vsel %vm1005, %v1295, 0
        %1313 = vmatpush.msra.mxu0 0.0
        %1314 = vmatpush.msra.mxu0 0.0
        %1315 = vmatpush.msra.mxu0 0.0
        %1316 = vmatpush.msra.mxu0 0.0
        %1317 = vmatpush.msra.mxu0 0.0
        %1318 = vmatpush.msra.mxu0 0.0
        %1319 = vmatpush.msra.mxu0 0.0
        %1320 = vmatpush.msra.mxu0 0.0
        %1321 = vmatpush.msra.mxu0 0.0
        %1322 = vmatpush.msra.mxu0 0.0
        %1323 = vmatpush.msra.mxu0 0.0
        %1324 = vmatpush.msra.mxu0 0.0
        %1325 = vmatpush.msra.mxu0 0.0
        %1326 = vmatpush.msra.mxu0 0.0
        %1327 = vmatpush.msra.mxu0 %v1302
        %1328 = vmatpush.msra.mxu0 %v1301
        %1329 = vmatmul.f32.gmra.mxu0 %v1311
        %v1330 = vpop.f32.mrf.mxu0
        %v1331 = vadd.f32 %v1310, %v1330
        %1332 = vdwg.mxu0
        %v1333 = vld [vmem:[%s21 + $0x1] sm:$0x1]
        %1335 = vset.pattern.permute.xlu0 0
        %1336 = vperm.xlu0 %1335, %v1300
        %v1337 = vpop.permute.xlu0 %1336
        %v1339 = vperm.slane %v1333, 0
        %v1340 = vmul.f32 %v1337, %v1339
        %v1341 = vadd.f32 %v1331, %v1340
        %v1342 = vld [vmem:[%s22] sm:$0x1]
        %v1344 = vperm.slane %v1342, 0
        %v1346 = vadd.f32 %v1341, %v1344
        %v1347 = vxor.u32 %v1346, 2147483648
        %v1348 = vmul.f32 %v1347, 1.442695
        %v1349 = vpow.pop %v1348
        %v1350 = vadd.f32 %v1349, 1.0
        %v1351 = vrcp.pop %v1350
        %v1352 = vmul.f32 %v1350, %v1351
        %v1353 = vsub.f32 1.0, %v1352
        %v1354 = vmul.f32 %v1351, %v1353
        %v1355 = vadd.f32 %v1351, %v1354
        %vm1356 = vweird.f32 %v1350
        %vm1357 = vweird.f32 %v1351
        %vm1358 = vmor %vm1356, %vm1357
        %v1359 = vsel %vm1358, %v1351, %v1355
        %v1360 = vand.u32 2147483647, %v1350
        %vm1361 = vcmp.eq.f32.partialorder %v1360, 8.507059e+37
        %v1362 = vand.u32 %v1350, 2147483648
        %v1363 = vor.u32 1.1754944e-38, %v1362
        %v1364 = vsel %vm1361, %v1363, %v1359
        %v1365 = vmul.f32 1.0, %v1364
        %v1366 = vld [vmem:[%s764] sm:$0x1]
        %v1367 = vld [vmem:[%s767] sm:$0x1]
        %v1368 = vld [vmem:[%s5] sm:$0x1]
        %v1369 = vsub.f32 %v1368, %v1366
        %v1370 = vsub.f32 %v1369, %v1367
        %v1371 = vmax.f32 %v1370, 0.0
        %v1372 = vmul.f32 %v1366, %v1371
        %v1373 = vrcp.pop %v1368
        %v1374 = vmul.f32 %v1372, %v1373
        %1376 = vset.pattern.permute.xlu0 8
        %1377 = vperm.xlu0 %1376, %v1365
        %v1378 = vpop.permute.xlu0 %1377
        %v1381 = vperm.slane %v1374, 0
        %v1383 = vmul.f32 %v1378, %v1381
        %1384 = vset.pattern.permute.xlu0 9
        %1385 = vperm.xlu0 %1384, %v1365
        %v1386 = vpop.permute.xlu0 %1385
        %v1389 = vperm.slane %v1366, 0
        %v1391 = vmul.f32 %v1386, %v1389
        %v1392 = vsub.f32 %v1383, %v1391
        %1394 = vrot.lane.b32.xlu0 %v1392, 8
        %v1395 = vpop.permute.xlu0 %1394
        %1398 = vrot.lane.b32.xlu0 %v1391, 12
        %v1399 = vpop.permute.xlu0 %1398
        %v1401 = vsel %vm780, %v1346, %v1395
        %vm1402 = vcmask 97280
        %v1403 = vsel %vm1402, %v1401, %v1399
        %v1404 = vsel %vm1005, %v1403, %v1292
        %v1405 = vsel %vm1231, %v1404, 0.0
        %1406 = vst [vmem:[%s749] sm:$0xf] %v1405
        %s1407 = sand.u32 %s553, 1
        %s1408 = scalar_lea.sflag [#allocation4], %s1407
        %s1409 = sand.u32 %s553, 1
        %s1410 = smul.addr %s1409, 4
        %s1411 = scalar_lea.vmem [#allocation3], %s1410
        // Predicated region
        $region117: #{tpu_custom_call.1} parent=111 // pred_check
          %p1412 = pneg %p563
        $region118: #{tpu_custom_call.1} parent=111 // pred_check_branch
          %1414 = sbr.rel (%p1412) target = $region120
        $region119: #{tpu_custom_call.1} parent=111 // pred_region
          %1416 = vsyncadd %s1408, 0
          %s1417 = smul.addr %s37, 4
          %s1418 = scalar_lea.hbm %s23, %s1417
          %s1420 = sshll.u32 %s1411, 4
          %s1421 = int_to_ptr.vmem [resolvable:$true] %s1420
          %s1422 = sshll.u32 %s1418, 4
          %s1423 = int_to_ptr.hbm [resolvable:$true] %s1422
          %1425 = dma.vmem_to_hbm [thread:$0]  %s1421, 64, %s1423, %s1408
        $region120: #{tpu_custom_call.1} parent=111 // pred_fallthru
          _
      $region112: #{tpu_custom_call.1} parent=5 // pred_fallthru
        _
      %p1426 = scmp.le.s32.totalorder 2, %s32
      // Predicated region
      $region121: #{tpu_custom_call.1} parent=5 // pred_check
        %p1427 = pneg %p1426
      $region122: #{tpu_custom_call.1} parent=5 // pred_check_branch
        %1429 = sbr.rel (%p1427) target = $region124
      $region123: #{tpu_custom_call.1} parent=5 // pred_region
        %s1430 = ssub.s32 %s32, 2
        // Predicated region
        $region125: #{tpu_custom_call.1} parent=123 // pred_check
          %p1431 = pneg %p569
        $region126: #{tpu_custom_call.1} parent=123 // pred_check_branch
          %1433 = sbr.rel (%p1431) target = $region128
        $region127: #{tpu_custom_call.1} parent=123 // pred_region
          %s1434 = sand.u32 %s554, 1
          %s1435 = scalar_lea.sflag [#allocation4], %s1434
          %s1436 = sand.u32 %s554, 1
          %s1437 = smul.addr %s1436, 4
          %s1438 = scalar_lea.vmem [#allocation3], %s1437
          %1440 = dma.done %s1435, 64
        $region128: #{tpu_custom_call.1} parent=123 // pred_fallthru
          _
      $region124: #{tpu_custom_call.1} parent=5 // pred_fallthru
        _
    $region6: #{tpu_custom_call.1} parent=1 // loop_footer
      %s36 = sadd.s32 1, %s32
    $region7: #{tpu_custom_call.1} parent=1 // loop_footer_branch
      %31 = sbr.rel target = $region3
    $region8: #{tpu_custom_call.1} parent=1 // loop_exit
      _
    %1441 = vsyncpa [#allocation4], 1
    %s1442 = scalar_lea.sflag [#allocation4], 1
    %1443 = vsyncpa %s1442, 1

</llo_original>
